<compile_context>
chip_gen: v7x
topology: tpu7x:2x2x1
jax: 0.10.0
libtpu: 0.0.40
codegen_flags: <defaults>
</compile_context>

<pallas_src>
import functools

import jax
import jax.numpy as jnp
from jax import lax
from jax.experimental import pallas as pl
from jax.experimental.pallas import tpu as pltpu

LANE = 128
_ADJ_DT = jnp.int8        # 0/1 adjacency stored as int8 in HBM (exact)
_ACT_DT = jnp.bfloat16    # activations carried in bf16; f32 MXU accumulation
_ADJ_BYTES = 1
_ACT_BYTES = 2


def _round_up(x, m):
    return (x + m - 1) // m * m


def _vmem_limit_bytes():
    """Per-TensorCore scoped-VMEM limit, generation aware."""
    try:
        cap = int(pltpu.get_tpu_info().vmem_capacity_bytes)
    except Exception:
        cap = 64 * 1024 * 1024
    if cap >= 96 * 1024 * 1024:          # v5e / v6e: 128 MiB physical VMEM
        return 100 * 1024 * 1024
    return 52 * 1024 * 1024              # v7x: 64 MiB per TC -> keep headroom


def _plan_row_tiling(n, m, f_out_p, vmem_limit, tile_rows=None):
    """Row-tile sizes and padded row counts for the node (n) and HAG (m) axes.

    Per-TC VMEM accounting for the aggregation kernel:
      resident : z (n_p x F) + r (m_p x F) in bf16 (budgeted x2 defensively)
      pipelined: A_u/A_h int8 row tiles (x2 buffers) + output tile (x2, f32)
    """
    n128 = _round_up(max(n, 1), LANE)
    m128 = _round_up(max(m, 1), LANE)
    if tile_rows is None:
        headroom = 2 * 1024 * 1024
        resident = 2 * (n128 + m128) * f_out_p * _ACT_BYTES
        budget = max(vmem_limit - resident - headroom, 1)
        per_row = 2 * (n128 + m128) * _ADJ_BYTES + 2 * f_out_p * 4
        cap = budget // per_row
        cap = max(256, min((cap // 256) * 256, 2048))     # MXU-aligned row cap
        steps = pl.cdiv(n128, cap)
        tile_n = _round_up(pl.cdiv(n128, steps), LANE)    # near-even 128-aligned split
    else:
        tile_n = int(tile_rows)
        if tile_n % LANE != 0:
            assert LANE % tile_n == 0 and tile_n % 32 == 0, (
                "tile_rows must be a multiple of 128, or a multiple of 32 "
                "that divides 128 (int8 sublane packing)")
    n_p = _round_up(n128, tile_n)
    if tile_n % LANE == 0:
        steps_m = pl.cdiv(m128, tile_n)
        tile_m = _round_up(pl.cdiv(m128, steps_m), LANE)
    else:
        tile_m = tile_n
    m_p = _round_up(m128, tile_m)
    return tile_n, n_p, tile_m, m_p


# ---------------------------------------------------------------------------
# Kernels (all row-tiled; "resident" operands are untiled full-VMEM inputs)
# ---------------------------------------------------------------------------
def _linear_kernel(x_ref, w_ref, b_ref, z_ref):
    # z = x @ W + b  (f32 MXU accumulation; stored bf16 for the aggregation)
    xv = x_ref[...].astype(jnp.float32)
    z = jnp.dot(xv, w_ref[...], preferred_element_type=jnp.float32) + b_ref[...]
    z_ref[...] = z.astype(z_ref.dtype)


def _reduce_kernel(hr_ref, z_ref, r_ref):
    # r = hag_r @ z  (int8 adjacency widened to bf16 right before the MXU)
    a = hr_ref[...].astype(_ACT_DT)
    r = jnp.dot(a, z_ref[...], preferred_element_type=jnp.float32)
    r_ref[...] = r.astype(r_ref.dtype)


def _agg_kernel(au_ref, ah_ref, z_ref, r_ref, out_ref, *, epilogue, valid_cols):
    # out = hag_u @ z + hag @ r  (fused with the layer epilogue)
    au = au_ref[...].astype(_ACT_DT)
    ah = ah_ref[...].astype(_ACT_DT)
    agg = jnp.dot(au, z_ref[...], preferred_element_type=jnp.float32)
    agg = agg + jnp.dot(ah, r_ref[...], preferred_element_type=jnp.float32)
    if epilogue == "relu":
        out_ref[...] = jnp.maximum(agg, 0.0).astype(out_ref.dtype)
    else:  # masked log_softmax over the first `valid_cols` real feature lanes
        col = lax.broadcasted_iota(jnp.int32, agg.shape, 1)
        valid = col < valid_cols
        masked = jnp.where(valid, agg, -jnp.inf)
        mx = jnp.max(masked, axis=1, keepdims=True)
        s = masked - mx
        lse = jnp.log(jnp.sum(jnp.exp(s), axis=1, keepdims=True))
        out_ref[...] = jnp.where(valid, s - lse, 0.0).astype(out_ref.dtype)


_RESIDENT = pl.BlockSpec(memory_space=pltpu.MemorySpace.VMEM)  # untiled, 1 copy


def _gcn_layer(x_p, w_p, b_p, au_p, ah_p, hr_p, *, tile_n, tile_m,
               epilogue, valid_cols, out_dtype, vmem_limit):
    n_p, f_in_p = x_p.shape
    f_out_p = w_p.shape[1]
    m_p = hr_p.shape[0]

    def cparams():
        return pltpu.CompilerParams(dimension_semantics=("parallel",),
                                    vmem_limit_bytes=vmem_limit)

    # 1) z = x @ W + b : row-tiled over nodes; W, b resident in VMEM.
    z = pl.pallas_call(
        _linear_kernel,
        out_shape=jax.ShapeDtypeStruct((n_p, f_out_p), _ACT_DT),
        grid_spec=pltpu.PrefetchScalarGridSpec(
            num_scalar_prefetch=0,
            grid=(n_p // tile_n,),
            in_specs=[pl.BlockSpec((tile_n, f_in_p), lambda i: (i, 0)),
                      _RESIDENT, _RESIDENT],
            out_specs=pl.BlockSpec((tile_n, f_out_p), lambda i: (i, 0))),
        compiler_params=cparams(),
    )(x_p, w_p, b_p)

    # 2) r = hag_r @ z : row-tiled over HAG aggregation nodes; z resident.
    r = pl.pallas_call(
        _reduce_kernel,
        out_shape=jax.ShapeDtypeStruct((m_p, f_out_p), _ACT_DT),
        grid_spec=pltpu.PrefetchScalarGridSpec(
            num_scalar_prefetch=0,
            grid=(m_p // tile_m,),
            in_specs=[pl.BlockSpec((tile_m, n_p), lambda i: (i, 0)),
                      _RESIDENT],
            out_specs=pl.BlockSpec((tile_m, f_out_p), lambda i: (i, 0))),
        compiler_params=cparams(),
    )(hr_p, z)

    # 3) out = hag_u @ z + hag @ r (+ epilogue): the HBM-bound contraction.
    out_bytes = 4 if out_dtype == jnp.float32 else _ACT_BYTES
    cost = pl.CostEstimate(
        flops=2 * n_p * (n_p + m_p) * f_out_p,
        transcendentals=(n_p * f_out_p if epilogue == "log_softmax" else 0),
        bytes_accessed=(n_p * (n_p + m_p) * _ADJ_BYTES
                        + (n_p + m_p) * f_out_p * _ACT_BYTES
                        + n_p * f_out_p * out_bytes))
    out = pl.pallas_call(
        functools.partial(_agg_kernel, epilogue=epilogue, valid_cols=valid_cols),
        out_shape=jax.ShapeDtypeStruct((n_p, f_out_p), out_dtype),
        grid_spec=pltpu.PrefetchScalarGridSpec(
            num_scalar_prefetch=0,
            grid=(n_p // tile_n,),
            in_specs=[pl.BlockSpec((tile_n, n_p), lambda i: (i, 0)),   # hag_u rows
                      pl.BlockSpec((tile_n, m_p), lambda i: (i, 0)),   # hag rows
                      _RESIDENT, _RESIDENT],                           # z, r
            out_specs=pl.BlockSpec((tile_n, f_out_p), lambda i: (i, 0))),
        compiler_params=cparams(),
        cost_estimate=cost,
    )(au_p, ah_p, z, r)
    return out


def make_gcn_forward(hag_u, hag_r, hag, in_features, hidden_features,
                     out_features, *, tile_rows=None):
    """Builds the padded int8 adjacency operands once and returns a jitted
    forward(x, w1, b1, w2, b2) -> log-probs [N, out_features] (float32)."""
    n = hag_u.shape[0]
    m = hag_r.shape[0]
    assert hag_u.shape == (n, n) and hag_r.shape == (m, n) and hag.shape == (n, m)

    fi_p = _round_up(in_features, LANE)
    hid_p = _round_up(hidden_features, LANE)
    fo_p = _round_up(out_features, LANE)

    vmem_limit = _vmem_limit_bytes()
    tile_n, n_p, tile_m, m_p = _plan_row_tiling(
        n, m, max(hid_p, fo_p), vmem_limit, tile_rows)
    assert n_p % tile_n == 0 and m_p % tile_m == 0

    # Adjacency padded + cast to int8 ONCE (hoisted out of the per-call path).
    au_p = jnp.zeros((n_p, n_p), _ADJ_DT).at[:n, :n].set(hag_u.astype(_ADJ_DT))
    ah_p = jnp.zeros((n_p, m_p), _ADJ_DT).at[:n, :m].set(hag.astype(_ADJ_DT))
    hr_p = jnp.zeros((m_p, n_p), _ADJ_DT).at[:m, :n].set(hag_r.astype(_ADJ_DT))
    # TODO(synk): on v7x the MXU consumes fp8 natively; storing A as
    # float8_e4m3 would drop the in-kernel int8->bf16 widen entirely.
    # TODO(synk): for graphs where (n_p+m_p)*F*2B no longer fits per-TC VMEM,
    # add a contraction grid axis with an f32 accumulator instead of keeping
    # z/r fully resident.

    def _forward(x, w1, b1, w2, b2, au, ah, hr):
        f32 = jnp.float32
        x_p = jnp.zeros((n_p, fi_p), f32).at[:n, :in_features].set(x.astype(f32))
        w1_p = jnp.zeros((fi_p, hid_p), f32).at[:in_features, :hidden_features].set(w1)
        b1_p = jnp.zeros((1, hid_p), f32).at[:, :hidden_features].set(b1)
        w2_p = jnp.zeros((hid_p, fo_p), f32).at[:hidden_features, :out_features].set(w2)
        b2_p = jnp.zeros((1, fo_p), f32).at[:, :out_features].set(b2)

        h1 = _gcn_layer(x_p, w1_p, b1_p, au, ah, hr,
                        tile_n=tile_n, tile_m=tile_m, epilogue="relu",
                        valid_cols=hid_p, out_dtype=_ACT_DT,
                        vmem_limit=vmem_limit)
        out = _gcn_layer(h1, w2_p, b2_p, au, ah, hr,
                         tile_n=tile_n, tile_m=tile_m, epilogue="log_softmax",
                         valid_cols=out_features, out_dtype=jnp.float32,
                         vmem_limit=vmem_limit)
        return out[:n, :out_features]

    fwd = jax.jit(_forward)
    return lambda x, w1, b1, w2, b2: fwd(x, w1, b1, w2, b2, au_p, ah_p, hr_p)


def init_linear(key, fan_in, fan_out):
    # matches torch.nn.Linear default init: U(-1/sqrt(fan_in), 1/sqrt(fan_in));
    # weight stored pre-transposed as [in, out]
    kw, kb = jax.random.split(key)
    bound = 1.0 / jnp.sqrt(jnp.float32(fan_in))
    w = jax.random.uniform(kw, (fan_in, fan_out), jnp.float32, -bound, bound)
    b = jax.random.uniform(kb, (1, fan_out), jnp.float32, -bound, bound)
    return w, b


if __name__ == "__main__":
    # Small synthetic graph: N nodes, M HAG aggregation nodes.
    N, M = 64, 32
    in_features, hidden_features, out_features = 32, 16, 8

    key = jax.random.PRNGKey(0)
    kx, ku, kr, kh, k1, k2 = jax.random.split(key, 6)

    x = jax.random.normal(kx, (N, in_features), jnp.float32)

    # Deterministic synthetic dense adjacency pieces (~10% density, binary).
    hag_u = (jax.random.uniform(ku, (N, N)) < 0.1).astype(jnp.float32)
    hag_r = (jax.random.uniform(kr, (M, N)) < 0.1).astype(jnp.float32)
    hag = (jax.random.uniform(kh, (N, M)) < 0.1).astype(jnp.float32)

    w1, b1 = init_linear(k1, in_features, hidden_features)
    w2, b2 = init_linear(k2, hidden_features, out_features)

    # Exercise the generation-aware auto tile planner ...
    auto = _plan_row_tiling(N, M, LANE, _vmem_limit_bytes())
    assert auto[1] % auto[0] == 0 and auto[3] % auto[2] == 0

    # ... but run with an explicit small tile so the toy graph exercises
    # multi-step row-tiled grids (4 steps on both the node and HAG axes).
    gcn = make_gcn_forward(hag_u, hag_r, hag, in_features, hidden_features,
                           out_features, tile_rows=32)
    out = jax.block_until_ready(gcn(x, w1, b1, w2, b2))

    # Plain-JAX reference mirroring the kernel's precision choices
    # (0/1 adjacency in bf16, bf16 activations, f32 accumulation).
    def ref_forward(xv):
        hu = hag_u.astype(jnp.bfloat16)
        hr = hag_r.astype(jnp.bfloat16)
        hg = hag.astype(jnp.bfloat16)

        def layer(h_in, w, b):
            z = (jnp.dot(h_in.astype(jnp.float32), w,
                         precision=lax.Precision.HIGHEST,
                         preferred_element_type=jnp.float32) + b)
            z = z.astype(jnp.bfloat16)
            r = jnp.dot(hr, z, preferred_element_type=jnp.float32).astype(jnp.bfloat16)
            return (jnp.dot(hu, z, preferred_element_type=jnp.float32)
                    + jnp.dot(hg, r, preferred_element_type=jnp.float32))

        h = jnp.maximum(layer(xv, w1, b1), 0.0).astype(jnp.bfloat16)
        o = layer(h, w2, b2)
        return jax.nn.log_softmax(o, axis=1)

    ref = ref_forward(x)
    assert out.shape == (N, out_features)
    max_err = float(jnp.max(jnp.abs(out - ref)))
    assert jnp.allclose(out, ref, atol=5e-2, rtol=5e-2), (
        "mismatch vs reference: max abs diff = %g" % max_err)
    print("KERNEL_OK")
</pallas_src>

<mosaic_0001>
module attributes {stable_mosaic.version = 11 : i64} {
  func.func @_linear_kernel(%arg0: i32, %arg1: memref<32x128xf32, #tpu.memory_space<vmem>>, %arg2: memref<128x128xf32, #tpu.memory_space<vmem>>, %arg3: memref<1x128xf32, #tpu.memory_space<vmem>>, %arg4: memref<32x128xbf16, #tpu.memory_space<vmem>>) attributes {dimension_semantics = [#tpu.dimension_semantics<parallel>], iteration_bounds = array<i64: 4>, scalar_prefetch = 0 : i64, scratch_operands = 0 : i64, tpu.core_type = #tpu.core_type<tc>, window_params = [{transform_indices = @transform_0, window_bounds = array<i64: 32, 128>}, {pipeline_mode = #tpu.pipeline_mode<synchronous>, transform_indices = @transform_1, window_bounds = array<i64: 128, 128>}, {pipeline_mode = #tpu.pipeline_mode<synchronous>, transform_indices = @transform_2, window_bounds = array<i64: 1, 128>}, {transform_indices = @transform_3, window_bounds = array<i64: 32, 128>}]} {
    %c0 = arith.constant 0 : index
    %c0_0 = arith.constant 0 : index
    %0 = vector.load %arg1[%c0, %c0_0] : memref<32x128xf32, #tpu.memory_space<vmem>>, vector<32x128xf32>
    %c0_1 = arith.constant 0 : index
    %c0_2 = arith.constant 0 : index
    %1 = vector.load %arg2[%c0_1, %c0_2] : memref<128x128xf32, #tpu.memory_space<vmem>>, vector<128x128xf32>
    %cst = arith.constant dense<0.000000e+00> : vector<32x128xf32>
    %2 = tpu.matmul %0, %1, %cst {dimension_numbers = #tpu.dot_dimension_numbers<[1], [0], [0], [1], [0, 0, 1, 1], [], []>} : vector<32x128xf32>, vector<128x128xf32>, vector<32x128xf32> -> vector<32x128xf32>
    %c0_3 = arith.constant 0 : index
    %c0_4 = arith.constant 0 : index
    %3 = vector.load %arg3[%c0_3, %c0_4] : memref<1x128xf32, #tpu.memory_space<vmem>>, vector<1x128xf32>
    %4 = vector.broadcast %3 : vector<1x128xf32> to vector<32x128xf32>
    %5 = arith.addf %2, %4 : vector<32x128xf32>
    %6 = arith.truncf %5 : vector<32x128xf32> to vector<32x128xbf16>
    %c0_5 = arith.constant 0 : index
    %c0_6 = arith.constant 0 : index
    %7 = vector.load %arg4[%c0_5, %c0_6] : memref<32x128xbf16, #tpu.memory_space<vmem>>, vector<32x128xbf16>
    tpu.vector_store %arg4[%c0_5, %c0_6], %6 {strides = array<i32>} : memref<32x128xbf16, #tpu.memory_space<vmem>>, vector<32x128xbf16>,
    return
  }
  func.func @transform_0(%arg0: i32) -> (i32, i32) {
    %c0_i32 = arith.constant 0 : i32
    %c0_i32_0 = arith.constant 0 : i32
    return %arg0, %c0_i32 : i32, i32
  }
  func.func @transform_1(%arg0: i32) -> (i32, i32) {
    %c0_i32 = arith.constant 0 : i32
    %c0_i32_0 = arith.constant 0 : i32
    %c0_i32_1 = arith.constant 0 : i32
    return %c0_i32, %c0_i32_0 : i32, i32
  }
  func.func @transform_2(%arg0: i32) -> (i32, i32) {
    %c0_i32 = arith.constant 0 : i32
    %c0_i32_0 = arith.constant 0 : i32
    %c0_i32_1 = arith.constant 0 : i32
    return %c0_i32, %c0_i32_0 : i32, i32
  }
  func.func @transform_3(%arg0: i32) -> (i32, i32) {
    %c0_i32 = arith.constant 0 : i32
    %c0_i32_0 = arith.constant 0 : i32
    return %arg0, %c0_i32 : i32, i32
  }
}

module attributes {stable_mosaic.version = 11 : i64} {
  func.func @_reduce_kernel(%arg0: i32, %arg1: memref<32x128xi8, #tpu.memory_space<vmem>>, %arg2: memref<128x128xbf16, #tpu.memory_space<vmem>>, %arg3: memref<32x128xbf16, #tpu.memory_space<vmem>>) attributes {dimension_semantics = [#tpu.dimension_semantics<parallel>], iteration_bounds = array<i64: 4>, scalar_prefetch = 0 : i64, scratch_operands = 0 : i64, tpu.core_type = #tpu.core_type<tc>, window_params = [{transform_indices = @transform_0, window_bounds = array<i64: 32, 128>}, {pipeline_mode = #tpu.pipeline_mode<synchronous>, transform_indices = @transform_1, window_bounds = array<i64: 128, 128>}, {transform_indices = @transform_2, window_bounds = array<i64: 32, 128>}]} {
    %c0 = arith.constant 0 : index
    %c0_0 = arith.constant 0 : index
    %0 = vector.load %arg1[%c0, %c0_0] : memref<32x128xi8, #tpu.memory_space<vmem>>, vector<32x128xi8>
    %1 = arith.sitofp %0 : vector<32x128xi8> to vector<32x128xbf16>
    %c0_1 = arith.constant 0 : index
    %c0_2 = arith.constant 0 : index
    %2 = vector.load %arg2[%c0_1, %c0_2] : memref<128x128xbf16, #tpu.memory_space<vmem>>, vector<128x128xbf16>
    %cst = arith.constant dense<0.000000e+00> : vector<32x128xf32>
    %3 = tpu.matmul %1, %2, %cst {dimension_numbers = #tpu.dot_dimension_numbers<[1], [0], [0], [1], [0, 0, 1, 1], [], []>} : vector<32x128xbf16>, vector<128x128xbf16>, vector<32x128xf32> -> vector<32x128xf32>
    %4 = arith.truncf %3 : vector<32x128xf32> to vector<32x128xbf16>
    %c0_3 = arith.constant 0 : index
    %c0_4 = arith.constant 0 : index
    %5 = vector.load %arg3[%c0_3, %c0_4] : memref<32x128xbf16, #tpu.memory_space<vmem>>, vector<32x128xbf16>
    tpu.vector_store %arg3[%c0_3, %c0_4], %4 {strides = array<i32>} : memref<32x128xbf16, #tpu.memory_space<vmem>>, vector<32x128xbf16>,
    return
  }
  func.func @transform_0(%arg0: i32) -> (i32, i32) {
    %c0_i32 = arith.constant 0 : i32
    %c0_i32_0 = arith.constant 0 : i32
    return %arg0, %c0_i32 : i32, i32
  }
  func.func @transform_1(%arg0: i32) -> (i32, i32) {
    %c0_i32 = arith.constant 0 : i32
    %c0_i32_0 = arith.constant 0 : i32
    %c0_i32_1 = arith.constant 0 : i32
    return %c0_i32, %c0_i32_0 : i32, i32
  }
  func.func @transform_2(%arg0: i32) -> (i32, i32) {
    %c0_i32 = arith.constant 0 : i32
    %c0_i32_0 = arith.constant 0 : i32
    return %arg0, %c0_i32 : i32, i32
  }
}

module attributes {stable_mosaic.version = 11 : i64} {
  func.func @_agg_kernel(%arg0: i32, %arg1: memref<32x128xi8, #tpu.memory_space<vmem>>, %arg2: memref<32x128xi8, #tpu.memory_space<vmem>>, %arg3: memref<128x128xbf16, #tpu.memory_space<vmem>>, %arg4: memref<128x128xbf16, #tpu.memory_space<vmem>>, %arg5: memref<32x128xbf16, #tpu.memory_space<vmem>>) attributes {dimension_semantics = [#tpu.dimension_semantics<parallel>], iteration_bounds = array<i64: 4>, scalar_prefetch = 0 : i64, scratch_operands = 0 : i64, tpu.core_type = #tpu.core_type<tc>, window_params = [{transform_indices = @transform_0, window_bounds = array<i64: 32, 128>}, {transform_indices = @transform_1, window_bounds = array<i64: 32, 128>}, {pipeline_mode = #tpu.pipeline_mode<synchronous>, transform_indices = @transform_2, window_bounds = array<i64: 128, 128>}, {pipeline_mode = #tpu.pipeline_mode<synchronous>, transform_indices = @transform_3, window_bounds = array<i64: 128, 128>}, {transform_indices = @transform_4, window_bounds = array<i64: 32, 128>}]} {
    %c0 = arith.constant 0 : index
    %c0_0 = arith.constant 0 : index
    %0 = vector.load %arg1[%c0, %c0_0] : memref<32x128xi8, #tpu.memory_space<vmem>>, vector<32x128xi8>
    %1 = arith.sitofp %0 : vector<32x128xi8> to vector<32x128xbf16>
    %c0_1 = arith.constant 0 : index
    %c0_2 = arith.constant 0 : index
    %2 = vector.load %arg2[%c0_1, %c0_2] : memref<32x128xi8, #tpu.memory_space<vmem>>, vector<32x128xi8>
    %3 = arith.sitofp %2 : vector<32x128xi8> to vector<32x128xbf16>
    %c0_3 = arith.constant 0 : index
    %c0_4 = arith.constant 0 : index
    %4 = vector.load %arg3[%c0_3, %c0_4] : memref<128x128xbf16, #tpu.memory_space<vmem>>, vector<128x128xbf16>
    %cst = arith.constant dense<0.000000e+00> : vector<32x128xf32>
    %5 = tpu.matmul %1, %4, %cst {dimension_numbers = #tpu.dot_dimension_numbers<[1], [0], [0], [1], [0, 0, 1, 1], [], []>} : vector<32x128xbf16>, vector<128x128xbf16>, vector<32x128xf32> -> vector<32x128xf32>
    %c0_5 = arith.constant 0 : index
    %c0_6 = arith.constant 0 : index
    %6 = vector.load %arg4[%c0_5, %c0_6] : memref<128x128xbf16, #tpu.memory_space<vmem>>, vector<128x128xbf16>
    %cst_7 = arith.constant dense<0.000000e+00> : vector<32x128xf32>
    %7 = tpu.matmul %3, %6, %cst_7 {dimension_numbers = #tpu.dot_dimension_numbers<[1], [0], [0], [1], [0, 0, 1, 1], [], []>} : vector<32x128xbf16>, vector<128x128xbf16>, vector<32x128xf32> -> vector<32x128xf32>
    %8 = arith.addf %5, %7 : vector<32x128xf32>
    %cst_8 = arith.constant 0.000000e+00 : f32
    %9 = vector.broadcast %cst_8 : f32 to vector<32x128xf32>
    %10 = arith.maximumf %8, %9 : vector<32x128xf32>
    %11 = arith.truncf %10 : vector<32x128xf32> to vector<32x128xbf16>
    %c0_9 = arith.constant 0 : index
    %c0_10 = arith.constant 0 : index
    %12 = vector.load %arg5[%c0_9, %c0_10] : memref<32x128xbf16, #tpu.memory_space<vmem>>, vector<32x128xbf16>
    tpu.vector_store %arg5[%c0_9, %c0_10], %11 {strides = array<i32>} : memref<32x128xbf16, #tpu.memory_space<vmem>>, vector<32x128xbf16>,
    return
  }
  func.func @transform_0(%arg0: i32) -> (i32, i32) {
    %c0_i32 = arith.constant 0 : i32
    %c0_i32_0 = arith.constant 0 : i32
    return %arg0, %c0_i32 : i32, i32
  }
  func.func @transform_1(%arg0: i32) -> (i32, i32) {
    %c0_i32 = arith.constant 0 : i32
    %c0_i32_0 = arith.constant 0 : i32
    return %arg0, %c0_i32 : i32, i32
  }
  func.func @transform_2(%arg0: i32) -> (i32, i32) {
    %c0_i32 = arith.constant 0 : i32
    %c0_i32_0 = arith.constant 0 : i32
    %c0_i32_1 = arith.constant 0 : i32
    return %c0_i32, %c0_i32_0 : i32, i32
  }
  func.func @transform_3(%arg0: i32) -> (i32, i32) {
    %c0_i32 = arith.constant 0 : i32
    %c0_i32_0 = arith.constant 0 : i32
    %c0_i32_1 = arith.constant 0 : i32
    return %c0_i32, %c0_i32_0 : i32, i32
  }
  func.func @transform_4(%arg0: i32) -> (i32, i32) {
    %c0_i32 = arith.constant 0 : i32
    %c0_i32_0 = arith.constant 0 : i32
    return %arg0, %c0_i32 : i32, i32
  }
}

module attributes {stable_mosaic.version = 11 : i64} {
  func.func @_linear_kernel(%arg0: i32, %arg1: memref<32x128xbf16, #tpu.memory_space<vmem>>, %arg2: memref<128x128xf32, #tpu.memory_space<vmem>>, %arg3: memref<1x128xf32, #tpu.memory_space<vmem>>, %arg4: memref<32x128xbf16, #tpu.memory_space<vmem>>) attributes {dimension_semantics = [#tpu.dimension_semantics<parallel>], iteration_bounds = array<i64: 4>, scalar_prefetch = 0 : i64, scratch_operands = 0 : i64, tpu.core_type = #tpu.core_type<tc>, window_params = [{transform_indices = @transform_0, window_bounds = array<i64: 32, 128>}, {pipeline_mode = #tpu.pipeline_mode<synchronous>, transform_indices = @transform_1, window_bounds = array<i64: 128, 128>}, {pipeline_mode = #tpu.pipeline_mode<synchronous>, transform_indices = @transform_2, window_bounds = array<i64: 1, 128>}, {transform_indices = @transform_3, window_bounds = array<i64: 32, 128>}]} {
    %c0 = arith.constant 0 : index
    %c0_0 = arith.constant 0 : index
    %0 = vector.load %arg1[%c0, %c0_0] : memref<32x128xbf16, #tpu.memory_space<vmem>>, vector<32x128xbf16>
    %1 = arith.extf %0 : vector<32x128xbf16> to vector<32x128xf32>
    %c0_1 = arith.constant 0 : index
    %c0_2 = arith.constant 0 : index
    %2 = vector.load %arg2[%c0_1, %c0_2] : memref<128x128xf32, #tpu.memory_space<vmem>>, vector<128x128xf32>
    %cst = arith.constant dense<0.000000e+00> : vector<32x128xf32>
    %3 = tpu.matmul %1, %2, %cst {dimension_numbers = #tpu.dot_dimension_numbers<[1], [0], [0], [1], [0, 0, 1, 1], [], []>} : vector<32x128xf32>, vector<128x128xf32>, vector<32x128xf32> -> vector<32x128xf32>
    %c0_3 = arith.constant 0 : index
    %c0_4 = arith.constant 0 : index
    %4 = vector.load %arg3[%c0_3, %c0_4] : memref<1x128xf32, #tpu.memory_space<vmem>>, vector<1x128xf32>
    %5 = vector.broadcast %4 : vector<1x128xf32> to vector<32x128xf32>
    %6 = arith.addf %3, %5 : vector<32x128xf32>
    %7 = arith.truncf %6 : vector<32x128xf32> to vector<32x128xbf16>
    %c0_5 = arith.constant 0 : index
    %c0_6 = arith.constant 0 : index
    %8 = vector.load %arg4[%c0_5, %c0_6] : memref<32x128xbf16, #tpu.memory_space<vmem>>, vector<32x128xbf16>
    tpu.vector_store %arg4[%c0_5, %c0_6], %7 {strides = array<i32>} : memref<32x128xbf16, #tpu.memory_space<vmem>>, vector<32x128xbf16>,
    return
  }
  func.func @transform_0(%arg0: i32) -> (i32, i32) {
    %c0_i32 = arith.constant 0 : i32
    %c0_i32_0 = arith.constant 0 : i32
    return %arg0, %c0_i32 : i32, i32
  }
  func.func @transform_1(%arg0: i32) -> (i32, i32) {
    %c0_i32 = arith.constant 0 : i32
    %c0_i32_0 = arith.constant 0 : i32
    %c0_i32_1 = arith.constant 0 : i32
    return %c0_i32, %c0_i32_0 : i32, i32
  }
  func.func @transform_2(%arg0: i32) -> (i32, i32) {
    %c0_i32 = arith.constant 0 : i32
    %c0_i32_0 = arith.constant 0 : i32
    %c0_i32_1 = arith.constant 0 : i32
    return %c0_i32, %c0_i32_0 : i32, i32
  }
  func.func @transform_3(%arg0: i32) -> (i32, i32) {
    %c0_i32 = arith.constant 0 : i32
    %c0_i32_0 = arith.constant 0 : i32
    return %arg0, %c0_i32 : i32, i32
  }
}

module attributes {stable_mosaic.version = 11 : i64} {
  func.func @_agg_kernel(%arg0: i32, %arg1: memref<32x128xi8, #tpu.memory_space<vmem>>, %arg2: memref<32x128xi8, #tpu.memory_space<vmem>>, %arg3: memref<128x128xbf16, #tpu.memory_space<vmem>>, %arg4: memref<128x128xbf16, #tpu.memory_space<vmem>>, %arg5: memref<32x128xf32, #tpu.memory_space<vmem>>) attributes {dimension_semantics = [#tpu.dimension_semantics<parallel>], iteration_bounds = array<i64: 4>, scalar_prefetch = 0 : i64, scratch_operands = 0 : i64, tpu.core_type = #tpu.core_type<tc>, window_params = [{transform_indices = @transform_0, window_bounds = array<i64: 32, 128>}, {transform_indices = @transform_1, window_bounds = array<i64: 32, 128>}, {pipeline_mode = #tpu.pipeline_mode<synchronous>, transform_indices = @transform_2, window_bounds = array<i64: 128, 128>}, {pipeline_mode = #tpu.pipeline_mode<synchronous>, transform_indices = @transform_3, window_bounds = array<i64: 128, 128>}, {transform_indices = @transform_4, window_bounds = array<i64: 32, 128>}]} {
    %c0 = arith.constant 0 : index
    %c0_0 = arith.constant 0 : index
    %0 = vector.load %arg1[%c0, %c0_0] : memref<32x128xi8, #tpu.memory_space<vmem>>, vector<32x128xi8>
    %1 = arith.sitofp %0 : vector<32x128xi8> to vector<32x128xbf16>
    %c0_1 = arith.constant 0 : index
    %c0_2 = arith.constant 0 : index
    %2 = vector.load %arg2[%c0_1, %c0_2] : memref<32x128xi8, #tpu.memory_space<vmem>>, vector<32x128xi8>
    %3 = arith.sitofp %2 : vector<32x128xi8> to vector<32x128xbf16>
    %c0_3 = arith.constant 0 : index
    %c0_4 = arith.constant 0 : index
    %4 = vector.load %arg3[%c0_3, %c0_4] : memref<128x128xbf16, #tpu.memory_space<vmem>>, vector<128x128xbf16>
    %cst = arith.constant dense<0.000000e+00> : vector<32x128xf32>
    %5 = tpu.matmul %1, %4, %cst {dimension_numbers = #tpu.dot_dimension_numbers<[1], [0], [0], [1], [0, 0, 1, 1], [], []>} : vector<32x128xbf16>, vector<128x128xbf16>, vector<32x128xf32> -> vector<32x128xf32>
    %c0_5 = arith.constant 0 : index
    %c0_6 = arith.constant 0 : index
    %6 = vector.load %arg4[%c0_5, %c0_6] : memref<128x128xbf16, #tpu.memory_space<vmem>>, vector<128x128xbf16>
    %cst_7 = arith.constant dense<0.000000e+00> : vector<32x128xf32>
    %7 = tpu.matmul %3, %6, %cst_7 {dimension_numbers = #tpu.dot_dimension_numbers<[1], [0], [0], [1], [0, 0, 1, 1], [], []>} : vector<32x128xbf16>, vector<128x128xbf16>, vector<32x128xf32> -> vector<32x128xf32>
    %8 = arith.addf %5, %7 : vector<32x128xf32>
    %9 = tpu.iota {dimensions = array<i32: 1>} : vector<32x128xi32>
    %c8_i32 = arith.constant 8 : i32
    %10 = vector.broadcast %c8_i32 : i32 to vector<32x128xi32>
    %11 = arith.cmpi slt, %9, %10 : vector<32x128xi32>
    %cst_8 = arith.constant 0xFF800000 : f32
    %12 = vector.broadcast %cst_8 : f32 to vector<32x128xf32>
    %13 = arith.select %11, %8, %12 : vector<32x128xi1>, vector<32x128xf32>
    %cst_9 = arith.constant dense<0xFF800000> : vector<32xf32>
    %14 = vector.multi_reduction <maximumf>, %13, %cst_9 [1] : vector<32x128xf32> to vector<32xf32>
    %15 = vector.shape_cast %14 : vector<32xf32> to vector<32x1xf32>
    %16 = vector.broadcast %15 : vector<32x1xf32> to vector<32x128xf32>
    %17 = arith.subf %13, %16 : vector<32x128xf32>
    %18 = math.exp %17 : vector<32x128xf32>
    %cst_10 = arith.constant dense<0.000000e+00> : vector<32xf32>
    %19 = vector.multi_reduction <add>, %18, %cst_10 [1] : vector<32x128xf32> to vector<32xf32>
    %20 = vector.shape_cast %19 : vector<32xf32> to vector<32x1xf32>
    %21 = math.log %20 : vector<32x1xf32>
    %22 = vector.broadcast %21 : vector<32x1xf32> to vector<32x128xf32>
    %23 = arith.subf %17, %22 : vector<32x128xf32>
    %cst_11 = arith.constant 0.000000e+00 : f32
    %24 = vector.broadcast %cst_11 : f32 to vector<32x128xf32>
    %25 = arith.select %11, %23, %24 : vector<32x128xi1>, vector<32x128xf32>
    %c0_12 = arith.constant 0 : index
    %c0_13 = arith.constant 0 : index
    %26 = vector.load %arg5[%c0_12, %c0_13] : memref<32x128xf32, #tpu.memory_space<vmem>>, vector<32x128xf32>
    tpu.vector_store %arg5[%c0_12, %c0_13], %25 {strides = array<i32>} : memref<32x128xf32, #tpu.memory_space<vmem>>, vector<32x128xf32>,
    return
  }
  func.func @transform_0(%arg0: i32) -> (i32, i32) {
    %c0_i32 = arith.constant 0 : i32
    %c0_i32_0 = arith.constant 0 : i32
    return %arg0, %c0_i32 : i32, i32
  }
  func.func @transform_1(%arg0: i32) -> (i32, i32) {
    %c0_i32 = arith.constant 0 : i32
    %c0_i32_0 = arith.constant 0 : i32
    return %arg0, %c0_i32 : i32, i32
  }
  func.func @transform_2(%arg0: i32) -> (i32, i32) {
    %c0_i32 = arith.constant 0 : i32
    %c0_i32_0 = arith.constant 0 : i32
    %c0_i32_1 = arith.constant 0 : i32
    return %c0_i32, %c0_i32_0 : i32, i32
  }
  func.func @transform_3(%arg0: i32) -> (i32, i32) {
    %c0_i32 = arith.constant 0 : i32
    %c0_i32_0 = arith.constant 0 : i32
    %c0_i32_1 = arith.constant 0 : i32
    return %c0_i32, %c0_i32_0 : i32, i32
  }
  func.func @transform_4(%arg0: i32) -> (i32, i32) {
    %c0_i32 = arith.constant 0 : i32
    %c0_i32_0 = arith.constant 0 : i32
    return %arg0, %c0_i32 : i32, i32
  }
}

</mosaic_0001>

<llo_original>
// kernel: _forward.6
$region0: #{_forward.6}
  #allocation0 [shape = 'u32[]', space=smem, size = 0x4, offset = 0x4, fixed_abs, tag = 'smem constant byte address 0x4 - core index']
  #allocation1 [shape = 'u32[144,128]{1,0:T(1,128)}', space=vmem, size = 0x12000, scoped, tag = 'internal scratch']
  %s0 = inlined_call_operand.vmem [shape: f32[128,128], index: 0, kind: input, shape index: {}]
  %s1 = inlined_call_operand.vmem [shape: f32[128,128], index: 1, kind: input, shape index: {}]
  %s2 = inlined_call_operand.vmem [shape: f32[1,128], index: 2, kind: input, shape index: {}]
  %s3 = inlined_call_operand.vmem [shape: bf16[128,128], index: 3, kind: output, shape index: {}]
  %s4 = sld [smem:[#allocation0]]
  $region45: #{_forward.6} parent=0
    _
  %s6 = ssub.s32 1, %s4
  %s7 = scalar_select 0, %s6, %s4
  loop: start=0, step=1, limit=6
  $region2: #{_forward.6} parent=0 // loop_pre_header
    _
  $region3: #{_forward.6} parent=0 // loop_header
    %s9 = sphi 0, %s13
    %p10 = scmp.ge.s32.totalorder %s9, 6
    %s19 = sphi 0, %s21
    %s22 = sphi 0, %s19
    %s23 = sphi 0, %s22
    %s39 = sphi 0, %s23
    %s43 = sphi 0, %s43
    %s45 = sphi 0, %s43
    %s46 = sphi 0, %s45
    %s60 = sphi 0, %s46
    %s64 = sphi 0, %s64
    %s66 = sphi 0, %s64
    %s67 = sphi 0, %s66
    %s81 = sphi 0, %s67
    %s87 = sphi 0, %s89
    %s90 = sphi 0, %s87
    %s91 = sphi 0, %s90
    %s107 = sphi 0, %s91
  $region4: #{_forward.6} parent=0 // loop_header_branch
    %12 = sbr.rel (%p10) target = $region8
  $region5: #{_forward.6} parent=0 // loop_body
    %s14 = ssub.s32 %s9, 1
    %s15 = ssub.s32 %s9, 2
    %s16 = sadd.s32 %s9, 1
    %s17 = ssub.s32 %s9, %s16
    %p18 = scmp.eq.s32.totalorder %s17, 0
    %s20 = sadd.s32 %s19, 1
    %s21 = scalar_select %p18, %s19, %s20
    %p24 = pneg %p18
    %p25 = scmp.eq.s32.totalorder %s9, 3
    %p26 = por %p24, %p25
    %p27 = scmp.ne.s32.totalorder %s19, %s22
    %p28 = scmp.eq.s32.totalorder %s9, 0
    %p29 = por %p27, %p28
    %p30 = scmp.ne.s32.totalorder %s19, %s22
    %p31 = scmp.eq.s32.totalorder %s14, 3
    %p32 = por %p30, %p31
    %p33 = scmp.ne.s32.totalorder %s22, %s23
    %p34 = scmp.eq.s32.totalorder %s14, 0
    %p35 = por %p33, %p34
    %p36 = scmp.ne.s32.totalorder %s22, %s23
    %p37 = scmp.eq.s32.totalorder %s15, 3
    %p38 = por %p36, %p37
    %p40 = scmp.ne.s32.totalorder %s23, %s39
    %p41 = scmp.eq.s32.totalorder %s15, 0
    %p42 = por %p40, %p41
    %s44 = sadd.s32 %s43, 1
    %p47 = scmp.eq.s32.totalorder %s9, 3
    %p48 = scmp.ne.s32.totalorder %s43, %s45
    %p49 = scmp.eq.s32.totalorder %s9, 0
    %p50 = por %p48, %p49
    %p51 = scmp.ne.s32.totalorder %s43, %s45
    %p52 = scmp.eq.s32.totalorder %s14, 3
    %p53 = por %p51, %p52
    %p54 = scmp.ne.s32.totalorder %s45, %s46
    %p55 = scmp.eq.s32.totalorder %s14, 0
    %p56 = por %p54, %p55
    %p57 = scmp.ne.s32.totalorder %s45, %s46
    %p58 = scmp.eq.s32.totalorder %s15, 3
    %p59 = por %p57, %p58
    %p61 = scmp.ne.s32.totalorder %s46, %s60
    %p62 = scmp.eq.s32.totalorder %s15, 0
    %p63 = por %p61, %p62
    %s65 = sadd.s32 %s64, 1
    %p68 = scmp.eq.s32.totalorder %s9, 3
    %p69 = scmp.ne.s32.totalorder %s64, %s66
    %p70 = scmp.eq.s32.totalorder %s9, 0
    %p71 = por %p69, %p70
    %p72 = scmp.ne.s32.totalorder %s64, %s66
    %p73 = scmp.eq.s32.totalorder %s14, 3
    %p74 = por %p72, %p73
    %p75 = scmp.ne.s32.totalorder %s66, %s67
    %p76 = scmp.eq.s32.totalorder %s14, 0
    %p77 = por %p75, %p76
    %p78 = scmp.ne.s32.totalorder %s66, %s67
    %p79 = scmp.eq.s32.totalorder %s15, 3
    %p80 = por %p78, %p79
    %p82 = scmp.ne.s32.totalorder %s67, %s81
    %p83 = scmp.eq.s32.totalorder %s15, 0
    %p84 = por %p82, %p83
    %s85 = ssub.s32 %s9, %s16
    %p86 = scmp.eq.s32.totalorder %s85, 0
    %s88 = sadd.s32 %s87, 1
    %s89 = scalar_select %p86, %s87, %s88
    %p92 = pneg %p86
    %p93 = scmp.eq.s32.totalorder %s9, 3
    %p94 = por %p92, %p93
    %p95 = scmp.ne.s32.totalorder %s87, %s90
    %p96 = scmp.eq.s32.totalorder %s9, 0
    %p97 = por %p95, %p96
    %p98 = scmp.ne.s32.totalorder %s87, %s90
    %p99 = scmp.eq.s32.totalorder %s14, 3
    %p100 = por %p98, %p99
    %p101 = scmp.ne.s32.totalorder %s90, %s91
    %p102 = scmp.eq.s32.totalorder %s14, 0
    %p103 = por %p101, %p102
    %p104 = scmp.ne.s32.totalorder %s90, %s91
    %p105 = scmp.eq.s32.totalorder %s15, 3
    %p106 = por %p104, %p105
    %p108 = scmp.ne.s32.totalorder %s91, %s107
    %p109 = scmp.eq.s32.totalorder %s15, 0
    %p110 = por %p108, %p109
    %p111 = scmp.le.s32.totalorder 1, %s9
    %p112 = scmp.lt.s32.totalorder %s9, 5
    %p113 = pnand %p111, %p112
    %p114 = pneg %p113
    // Predicated region
    $region9: #{_forward.6} parent=5 // pred_check
      _
    $region10: #{_forward.6} parent=5 // pred_check_branch
      %116 = sbr.rel (%p113) target = $region12
    $region11: #{_forward.6} parent=5 // pred_region
      %s117 = ssub.s32 %s9, 1
      // Predicated region
      $region13: #{_forward.6} parent=11 // pred_check
        %p118 = pneg %p56
      $region14: #{_forward.6} parent=11 // pred_check_branch
        %120 = sbr.rel (%p118) target = $region16
      $region15: #{_forward.6} parent=11 // pred_region
        _
      $region16: #{_forward.6} parent=11 // pred_fallthru
        _
      // Predicated region
      $region17: #{_forward.6} parent=11 // pred_check
        %p121 = pneg %p77
      $region18: #{_forward.6} parent=11 // pred_check_branch
        %123 = sbr.rel (%p121) target = $region20
      $region19: #{_forward.6} parent=11 // pred_region
        _
      $region20: #{_forward.6} parent=11 // pred_fallthru
        _
    $region12: #{_forward.6} parent=5 // pred_fallthru
      _
    %p124 = scmp.lt.s32.totalorder %s9, 4
    // Predicated region
    $region21: #{_forward.6} parent=5 // pred_check
      %p125 = pneg %p124
    $region22: #{_forward.6} parent=5 // pred_check_branch
      %127 = sbr.rel (%p125) target = $region24
    $region23: #{_forward.6} parent=5 // pred_region
      // Predicated region
      $region25: #{_forward.6} parent=23 // pred_check
        %p128 = pneg %p29
      $region26: #{_forward.6} parent=23 // pred_check_branch
        %130 = sbr.rel (%p128) target = $region28
      $region27: #{_forward.6} parent=23 // pred_region
        %s131 = smul.u32 4, %s9
        %p132 = scmp.lt.s32.totalorder %s131, 15
        %s133 = scalar_select %p132, %s131, 15
        %s134 = smul.addr %s133, 8
        %s135 = scalar_lea.vmem %s0, %s134
        %s136 = smul.u32 4, %s9
      $region28: #{_forward.6} parent=23 // pred_fallthru
        _
    $region24: #{_forward.6} parent=5 // pred_fallthru
      _
    %p137 = scmp.le.s32.totalorder 1, %s9
    %p138 = scmp.lt.s32.totalorder %s9, 5
    %p139 = pnand %p137, %p138
    %p140 = pneg %p139
    // Predicated region
    $region29: #{_forward.6} parent=5 // pred_check
      _
    $region30: #{_forward.6} parent=5 // pred_check_branch
      %142 = sbr.rel (%p139) target = $region32
    $region31: #{_forward.6} parent=5 // pred_region
      %s143 = ssub.s32 %s9, 1
      %s144 = smul.u32 4, %s14
      %p145 = scmp.lt.s32.totalorder %s144, 15
      %s146 = scalar_select %p145, %s144, 15
      %s147 = smul.addr %s146, 8
      %s148 = scalar_lea.vmem %s0, %s147
      %p149 = pneg %p35
      %p150 = pneg %p32
      %p151 = pneg %p56
      %p152 = pneg %p53
      %p153 = pneg %p77
      %p154 = pneg %p74
      %p155 = pneg %p103
      %p156 = pneg %p100
      %s157 = smul.u32 4, %s14
      %p158 = scmp.lt.s32.totalorder %s157, 15
      %s159 = scalar_select %p158, %s157, 15
      %s160 = smul.addr %s159, 4
      %s161 = scalar_lea.vmem %s3, %s160
      %s162 = smul.u32 4, %s14
      %p163 = scmp.lt.s32.totalorder %s162, 15
      %s164 = scalar_select %p163, %s162, 15
      %s165 = smul.addr %s164, 8
      %s166 = scalar_lea.vmem %s0, %s165
      %s167 = smul.u32 4, %s14
      %s168 = smul.u32 4, %s14
      %p169 = scmp.lt.s32.totalorder %s168, 15
      %s170 = scalar_select %p169, %s168, 15
      %s171 = smul.addr %s170, 4
      %s172 = scalar_lea.vmem %s3, %s171
      %s173 = smul.u32 4, %s14
      %v174 = vld [vmem:[%s166] sm:$0xff]
      %v175 = vld [vmem:[%s166 + $0x8] sm:$0xff]
      %v176 = vld [vmem:[%s166 + $0x10] sm:$0xff]
      %v177 = vld [vmem:[%s166 + $0x18] sm:$0xff]
      %v178 = vld [vmem:[%s1] sm:$0xff]
      %v179 = vld [vmem:[%s1 + $0x8] sm:$0xff]
      %v180 = vld [vmem:[%s1 + $0x10] sm:$0xff]
      %v181 = vld [vmem:[%s1 + $0x18] sm:$0xff]
      %v182 = vld [vmem:[%s1 + $0x20] sm:$0xff]
      %v183 = vld [vmem:[%s1 + $0x28] sm:$0xff]
      %v184 = vld [vmem:[%s1 + $0x30] sm:$0xff]
      %v185 = vld [vmem:[%s1 + $0x38] sm:$0xff]
      %v186 = vld [vmem:[%s1 + $0x40] sm:$0xff]
      %v187 = vld [vmem:[%s1 + $0x48] sm:$0xff]
      %v188 = vld [vmem:[%s1 + $0x50] sm:$0xff]
      %v189 = vld [vmem:[%s1 + $0x58] sm:$0xff]
      %v190 = vld [vmem:[%s1 + $0x60] sm:$0xff]
      %v191 = vld [vmem:[%s1 + $0x68] sm:$0xff]
      %v192 = vld [vmem:[%s1 + $0x70] sm:$0xff]
      %v193 = vld [vmem:[%s1 + $0x78] sm:$0xff]
      %v194 = vld [vmem:[%s2] sm:$0x1]
      %v196 = vlaneseq
      %v197 = vshrl.u32 %v196, 7
      %v198 = vsub.s32 0, %v197
      %v199 = vrot.slane %v194, %v198
      %201 = vmatprep.subr.mxu0 0.0
      %202 = vmatpush1.msra.mxu0 %v178
      %203 = vmatprep.subr.mxu0 0.0
      %204 = vmatpush1.msra.mxu0 %v179
      %205 = vmatprep.subr.mxu0 0.0
      %206 = vmatpush1.msra.mxu0 %v180
      %207 = vmatprep.subr.mxu0 0.0
      %208 = vmatpush1.msra.mxu0 %v181
      %209 = vmatprep.subr.mxu0 0.0
      %210 = vmatpush1.msra.mxu0 %v182
      %211 = vmatprep.subr.mxu0 0.0
      %212 = vmatpush1.msra.mxu0 %v183
      %213 = vmatprep.subr.mxu0 0.0
      %214 = vmatpush1.msra.mxu0 %v184
      %215 = vmatprep.subr.mxu0 0.0
      %216 = vmatpush1.msra.mxu0 %v185
      %217 = vmatprep.subr.mxu0 0.0
      %218 = vmatpush1.msra.mxu0 %v186
      %219 = vmatprep.subr.mxu0 0.0
      %220 = vmatpush1.msra.mxu0 %v187
      %221 = vmatprep.subr.mxu0 0.0
      %222 = vmatpush1.msra.mxu0 %v188
      %223 = vmatprep.subr.mxu0 0.0
      %224 = vmatpush1.msra.mxu0 %v189
      %225 = vmatprep.subr.mxu0 0.0
      %226 = vmatpush1.msra.mxu0 %v190
      %227 = vmatprep.subr.mxu0 0.0
      %228 = vmatpush1.msra.mxu0 %v191
      %229 = vmatprep.subr.mxu0 0.0
      %230 = vmatpush1.msra.mxu0 %v192
      %231 = vmatprep.subr.mxu0 0.0
      %232 = vmatpush1.msra.mxu0 %v193
      %233 = vmatprep.subr.mxu0 0.0
      %234 = vmatpush1.msra.mxu0 0.0
      %235 = vmatprep.subr.mxu0 0.0
      %236 = vmatpush1.msra.mxu0 0.0
      %237 = vmatprep.subr.mxu0 0.0
      %238 = vmatpush1.msra.mxu0 0.0
      %239 = vmatprep.subr.mxu0 0.0
      %240 = vmatpush1.msra.mxu0 0.0
      %241 = vmatprep.subr.mxu0 0.0
      %242 = vmatpush1.msra.mxu0 0.0
      %243 = vmatprep.subr.mxu0 0.0
      %244 = vmatpush1.msra.mxu0 0.0
      %245 = vmatprep.subr.mxu0 0.0
      %246 = vmatpush1.msra.mxu0 0.0
      %247 = vmatprep.subr.mxu0 0.0
      %248 = vmatpush1.msra.mxu0 0.0
      %249 = vmatprep.subr.mxu0 0.0
      %250 = vmatpush1.msra.mxu0 0.0
      %251 = vmatprep.subr.mxu0 0.0
      %252 = vmatpush1.msra.mxu0 0.0
      %253 = vmatprep.subr.mxu0 0.0
      %254 = vmatpush1.msra.mxu0 0.0
      %255 = vmatprep.subr.mxu0 0.0
      %256 = vmatpush1.msra.mxu0 0.0
      %257 = vmatprep.subr.mxu0 0.0
      %258 = vmatpush1.msra.mxu0 0.0
      %259 = vmatprep.subr.mxu0 0.0
      %260 = vmatpush1.msra.mxu0 0.0
      %261 = vmatprep.subr.mxu0 0.0
      %262 = vmatpush1.msra.mxu0 0.0
      %263 = vmatprep.subr.mxu0 0.0
      %264 = vmatpush1.msra.mxu0 0.0
      %265 = vmatprep.mubr.f32.mxu0 0.0
      %266 = vmatmul.mubr.f32.gmra.mrb[0].mxu0 %v174
      %v267 = vpop.f32.mrb[0].mxu0
      %v268 = vadd.f32 %v199, %v267
      %v269 = vpop.f32.mrb[0].mxu0
      %270 = vmatprep.mubr.f32.mxu0 0.0
      %271 = vmatmul.mubr.f32.gmra.mrb[0].mxu0 %v175
      %v272 = vpop.f32.mrb[0].mxu0
      %v273 = vadd.f32 %v199, %v272
      %v274 = vpop.f32.mrb[0].mxu0
      %275 = vmatprep.mubr.f32.mxu0 0.0
      %276 = vmatmul.mubr.f32.gmra.mrb[0].mxu0 %v176
      %v277 = vpop.f32.mrb[0].mxu0
      %v278 = vadd.f32 %v199, %v277
      %v279 = vpop.f32.mrb[0].mxu0
      %280 = vmatprep.mubr.f32.mxu0 0.0
      %281 = vmatmul.mubr.f32.gmra.mrb[0].mxu0 %v177
      %v282 = vpop.f32.mrb[0].mxu0
      %v283 = vadd.f32 %v199, %v282
      %v284 = vpop.f32.mrb[0].mxu0
      %285 = vdwg.mxu0
      %v286 = vpack.c.bf16 %v273, %v268
      %v287 = vpack.c.bf16 %v283, %v278
      %v290 = vunpack.c.l.b16 %v286
      %v291 = vunpack.c.h.b16 %v286
      %v292 = vunpack.c.l.b16 %v287
      %v293 = vunpack.c.h.b16 %v287
      %v294 = vpack.c.b16 %v290, %v290
      %v295 = vpack.c.b16 %v291, %v291
      %v296 = vpack.c.b16 %v292, %v292
      %v297 = vpack.c.b16 %v293, %v293
      %302 = vst [vmem:[%s172] sm:$0xf] %v294
      %303 = vst [vmem:[%s172 + $0x4] sm:$0xf] %v295
      %304 = vst [vmem:[%s172 + $0x8] sm:$0xf] %v296
      %305 = vst [vmem:[%s172 + $0xc] sm:$0xf] %v297
      %s306 = smul.u32 4, %s14
      %p307 = scmp.lt.s32.totalorder %s306, 15
      %s308 = scalar_select %p307, %s306, 15
      %s309 = smul.addr %s308, 4
      %s310 = scalar_lea.vmem %s3, %s309
      // Predicated region
      $region33: #{_forward.6} parent=31 // pred_check
        %p311 = pneg %p100
      $region34: #{_forward.6} parent=31 // pred_check_branch
        %313 = sbr.rel (%p311) target = $region36
      $region35: #{_forward.6} parent=31 // pred_region
        %s314 = smul.u32 4, %s14
      $region36: #{_forward.6} parent=31 // pred_fallthru
        _
    $region32: #{_forward.6} parent=5 // pred_fallthru
      _
    %p315 = scmp.le.s32.totalorder 2, %s9
    // Predicated region
    $region37: #{_forward.6} parent=5 // pred_check
      %p316 = pneg %p315
    $region38: #{_forward.6} parent=5 // pred_check_branch
      %318 = sbr.rel (%p316) target = $region40
    $region39: #{_forward.6} parent=5 // pred_region
      %s319 = ssub.s32 %s9, 2
      // Predicated region
      $region41: #{_forward.6} parent=39 // pred_check
        %p320 = pneg %p106
      $region42: #{_forward.6} parent=39 // pred_check_branch
        %322 = sbr.rel (%p320) target = $region44
      $region43: #{_forward.6} parent=39 // pred_region
        %s323 = smul.u32 4, %s15
        %p324 = scmp.lt.s32.totalorder %s323, 15
        %s325 = scalar_select %p324, %s323, 15
        %s326 = smul.addr %s325, 4
        %s327 = scalar_lea.vmem %s3, %s326
      $region44: #{_forward.6} parent=39 // pred_fallthru
        _
    $region40: #{_forward.6} parent=5 // pred_fallthru
      _
  $region6: #{_forward.6} parent=0 // loop_footer
    %s13 = sadd.s32 1, %s9
  $region7: #{_forward.6} parent=0 // loop_footer_branch
    %8 = sbr.rel target = $region3
  $region8: #{_forward.6} parent=0 // loop_exit
    _

// kernel: _forward.7
$region0: #{_forward.7}
  #allocation0 [shape = 'u32[]', space=smem, size = 0x4, offset = 0x4, fixed_abs, tag = 'smem constant byte address 0x4 - core index']
  #allocation1 [shape = 'u32[144,128]{1,0:T(1,128)}', space=vmem, size = 0x12000, scoped, tag = 'internal scratch']
  %s0 = inlined_call_operand.vmem [shape: s8[128,128], index: 0, kind: input, shape index: {}]
  %s1 = inlined_call_operand.vmem [shape: bf16[128,128], index: 1, kind: input, shape index: {}]
  %s2 = inlined_call_operand.vmem [shape: bf16[128,128], index: 2, kind: output, shape index: {}]
  %s3 = sld [smem:[#allocation0]]
  $region41: #{_forward.7} parent=0
    _
  %s5 = ssub.s32 1, %s3
  %s6 = scalar_select 0, %s5, %s3
  loop: start=0, step=1, limit=6
  $region2: #{_forward.7} parent=0 // loop_pre_header
    _
  $region3: #{_forward.7} parent=0 // loop_header
    %s8 = sphi 0, %s12
    %p9 = scmp.ge.s32.totalorder %s8, 6
    %s18 = sphi 0, %s20
    %s21 = sphi 0, %s18
    %s22 = sphi 0, %s21
    %s38 = sphi 0, %s22
    %s42 = sphi 0, %s42
    %s44 = sphi 0, %s42
    %s45 = sphi 0, %s44
    %s59 = sphi 0, %s45
    %s65 = sphi 0, %s67
    %s68 = sphi 0, %s65
    %s69 = sphi 0, %s68
    %s85 = sphi 0, %s69
  $region4: #{_forward.7} parent=0 // loop_header_branch
    %11 = sbr.rel (%p9) target = $region8
  $region5: #{_forward.7} parent=0 // loop_body
    %s13 = ssub.s32 %s8, 1
    %s14 = ssub.s32 %s8, 2
    %s15 = sadd.s32 %s8, 1
    %s16 = ssub.s32 %s8, %s15
    %p17 = scmp.eq.s32.totalorder %s16, 0
    %s19 = sadd.s32 %s18, 1
    %s20 = scalar_select %p17, %s18, %s19
    %p23 = pneg %p17
    %p24 = scmp.eq.s32.totalorder %s8, 3
    %p25 = por %p23, %p24
    %p26 = scmp.ne.s32.totalorder %s18, %s21
    %p27 = scmp.eq.s32.totalorder %s8, 0
    %p28 = por %p26, %p27
    %p29 = scmp.ne.s32.totalorder %s18, %s21
    %p30 = scmp.eq.s32.totalorder %s13, 3
    %p31 = por %p29, %p30
    %p32 = scmp.ne.s32.totalorder %s21, %s22
    %p33 = scmp.eq.s32.totalorder %s13, 0
    %p34 = por %p32, %p33
    %p35 = scmp.ne.s32.totalorder %s21, %s22
    %p36 = scmp.eq.s32.totalorder %s14, 3
    %p37 = por %p35, %p36
    %p39 = scmp.ne.s32.totalorder %s22, %s38
    %p40 = scmp.eq.s32.totalorder %s14, 0
    %p41 = por %p39, %p40
    %s43 = sadd.s32 %s42, 1
    %p46 = scmp.eq.s32.totalorder %s8, 3
    %p47 = scmp.ne.s32.totalorder %s42, %s44
    %p48 = scmp.eq.s32.totalorder %s8, 0
    %p49 = por %p47, %p48
    %p50 = scmp.ne.s32.totalorder %s42, %s44
    %p51 = scmp.eq.s32.totalorder %s13, 3
    %p52 = por %p50, %p51
    %p53 = scmp.ne.s32.totalorder %s44, %s45
    %p54 = scmp.eq.s32.totalorder %s13, 0
    %p55 = por %p53, %p54
    %p56 = scmp.ne.s32.totalorder %s44, %s45
    %p57 = scmp.eq.s32.totalorder %s14, 3
    %p58 = por %p56, %p57
    %p60 = scmp.ne.s32.totalorder %s45, %s59
    %p61 = scmp.eq.s32.totalorder %s14, 0
    %p62 = por %p60, %p61
    %s63 = ssub.s32 %s8, %s15
    %p64 = scmp.eq.s32.totalorder %s63, 0
    %s66 = sadd.s32 %s65, 1
    %s67 = scalar_select %p64, %s65, %s66
    %p70 = pneg %p64
    %p71 = scmp.eq.s32.totalorder %s8, 3
    %p72 = por %p70, %p71
    %p73 = scmp.ne.s32.totalorder %s65, %s68
    %p74 = scmp.eq.s32.totalorder %s8, 0
    %p75 = por %p73, %p74
    %p76 = scmp.ne.s32.totalorder %s65, %s68
    %p77 = scmp.eq.s32.totalorder %s13, 3
    %p78 = por %p76, %p77
    %p79 = scmp.ne.s32.totalorder %s68, %s69
    %p80 = scmp.eq.s32.totalorder %s13, 0
    %p81 = por %p79, %p80
    %p82 = scmp.ne.s32.totalorder %s68, %s69
    %p83 = scmp.eq.s32.totalorder %s14, 3
    %p84 = por %p82, %p83
    %p86 = scmp.ne.s32.totalorder %s69, %s85
    %p87 = scmp.eq.s32.totalorder %s14, 0
    %p88 = por %p86, %p87
    %p89 = scmp.le.s32.totalorder 1, %s8
    %p90 = scmp.lt.s32.totalorder %s8, 5
    %p91 = pnand %p89, %p90
    %p92 = pneg %p91
    // Predicated region
    $region9: #{_forward.7} parent=5 // pred_check
      _
    $region10: #{_forward.7} parent=5 // pred_check_branch
      %94 = sbr.rel (%p91) target = $region12
    $region11: #{_forward.7} parent=5 // pred_region
      %s95 = ssub.s32 %s8, 1
      // Predicated region
      $region13: #{_forward.7} parent=11 // pred_check
        %p96 = pneg %p55
      $region14: #{_forward.7} parent=11 // pred_check_branch
        %98 = sbr.rel (%p96) target = $region16
      $region15: #{_forward.7} parent=11 // pred_region
        _
      $region16: #{_forward.7} parent=11 // pred_fallthru
        _
    $region12: #{_forward.7} parent=5 // pred_fallthru
      _
    %p99 = scmp.lt.s32.totalorder %s8, 4
    // Predicated region
    $region17: #{_forward.7} parent=5 // pred_check
      %p100 = pneg %p99
    $region18: #{_forward.7} parent=5 // pred_check_branch
      %102 = sbr.rel (%p100) target = $region20
    $region19: #{_forward.7} parent=5 // pred_region
      // Predicated region
      $region21: #{_forward.7} parent=19 // pred_check
        %p103 = pneg %p28
      $region22: #{_forward.7} parent=19 // pred_check_branch
        %105 = sbr.rel (%p103) target = $region24
      $region23: #{_forward.7} parent=19 // pred_region
        %p106 = scmp.lt.s32.totalorder %s8, 3
        %s107 = scalar_select %p106, %s8, 3
        %s108 = smul.addr %s107, 8
        %s109 = scalar_lea.vmem %s0, %s108
      $region24: #{_forward.7} parent=19 // pred_fallthru
        _
    $region20: #{_forward.7} parent=5 // pred_fallthru
      _
    %p110 = scmp.le.s32.totalorder 1, %s8
    %p111 = scmp.lt.s32.totalorder %s8, 5
    %p112 = pnand %p110, %p111
    %p113 = pneg %p112
    // Predicated region
    $region25: #{_forward.7} parent=5 // pred_check
      _
    $region26: #{_forward.7} parent=5 // pred_check_branch
      %115 = sbr.rel (%p112) target = $region28
    $region27: #{_forward.7} parent=5 // pred_region
      %s116 = ssub.s32 %s8, 1
      %p117 = scmp.lt.s32.totalorder %s13, 3
      %s118 = scalar_select %p117, %s13, 3
      %s119 = smul.addr %s118, 8
      %s120 = scalar_lea.vmem %s0, %s119
      %p121 = pneg %p34
      %p122 = pneg %p31
      %p123 = pneg %p55
      %p124 = pneg %p52
      %p125 = pneg %p81
      %p126 = pneg %p78
      %s127 = smul.u32 4, %s13
      %p128 = scmp.lt.s32.totalorder %s127, 15
      %s129 = scalar_select %p128, %s127, 15
      %s130 = smul.addr %s129, 4
      %s131 = scalar_lea.vmem %s2, %s130
      %p132 = scmp.lt.s32.totalorder %s13, 3
      %s133 = scalar_select %p132, %s13, 3
      %s134 = smul.addr %s133, 8
      %s135 = scalar_lea.vmem %s0, %s134
      %s136 = smul.u32 4, %s13
      %p137 = scmp.lt.s32.totalorder %s136, 15
      %s138 = scalar_select %p137, %s136, 15
      %s139 = smul.addr %s138, 4
      %s140 = scalar_lea.vmem %s2, %s139
      %s141 = smul.u32 4, %s13
      %v143 = vld [vmem:[%s135] sm:$0xff]
      %v144 = vunpack.c.l.s8.bf16 %v143
      %v145 = vunpack.c.h.s8.bf16 %v143
      %v146 = vld [vmem:[%s1] sm:$0xf]
      %v147 = vld [vmem:[%s1 + $0x4] sm:$0xf]
      %v148 = vld [vmem:[%s1 + $0x8] sm:$0xf]
      %v149 = vld [vmem:[%s1 + $0xc] sm:$0xf]
      %v150 = vld [vmem:[%s1 + $0x10] sm:$0xf]
      %v151 = vld [vmem:[%s1 + $0x14] sm:$0xf]
      %v152 = vld [vmem:[%s1 + $0x18] sm:$0xf]
      %v153 = vld [vmem:[%s1 + $0x1c] sm:$0xf]
      %v154 = vld [vmem:[%s1 + $0x20] sm:$0xf]
      %v155 = vld [vmem:[%s1 + $0x24] sm:$0xf]
      %v156 = vld [vmem:[%s1 + $0x28] sm:$0xf]
      %v157 = vld [vmem:[%s1 + $0x2c] sm:$0xf]
      %v158 = vld [vmem:[%s1 + $0x30] sm:$0xf]
      %v159 = vld [vmem:[%s1 + $0x34] sm:$0xf]
      %v160 = vld [vmem:[%s1 + $0x38] sm:$0xf]
      %v161 = vld [vmem:[%s1 + $0x3c] sm:$0xf]
      %v178 = vunpack.c.l.b16 %v146
      %v179 = vunpack.c.l.b16 %v147
      %v180 = vunpack.c.l.b16 %v148
      %v181 = vunpack.c.l.b16 %v149
      %v182 = vunpack.c.l.b16 %v150
      %v183 = vunpack.c.l.b16 %v151
      %v184 = vunpack.c.l.b16 %v152
      %v185 = vunpack.c.l.b16 %v153
      %v186 = vunpack.c.l.b16 %v154
      %v187 = vunpack.c.l.b16 %v155
      %v188 = vunpack.c.l.b16 %v156
      %v189 = vunpack.c.l.b16 %v157
      %v190 = vunpack.c.l.b16 %v158
      %v191 = vunpack.c.l.b16 %v159
      %v192 = vunpack.c.l.b16 %v160
      %v193 = vunpack.c.l.b16 %v161
      %v194 = vpack.c.b16 %v179, %v178
      %v195 = vpack.c.b16 %v181, %v180
      %v196 = vpack.c.b16 %v183, %v182
      %v197 = vpack.c.b16 %v185, %v184
      %v198 = vpack.c.b16 %v187, %v186
      %v199 = vpack.c.b16 %v189, %v188
      %v200 = vpack.c.b16 %v191, %v190
      %v201 = vpack.c.b16 %v193, %v192
      %210 = vmatprep.subr.bf16.mxu0 0
      %211 = vmatpush1.bf16.msra.mxu0 %v194
      %212 = vmatprep.subr.bf16.mxu0 0
      %213 = vmatpush1.bf16.msra.mxu0 %v195
      %214 = vmatprep.subr.bf16.mxu0 0
      %215 = vmatpush1.bf16.msra.mxu0 %v196
      %216 = vmatprep.subr.bf16.mxu0 0
      %217 = vmatpush1.bf16.msra.mxu0 %v197
      %218 = vmatprep.subr.bf16.mxu0 0
      %219 = vmatpush1.bf16.msra.mxu0 %v198
      %220 = vmatprep.subr.bf16.mxu0 0
      %221 = vmatpush1.bf16.msra.mxu0 %v199
      %222 = vmatprep.subr.bf16.mxu0 0
      %223 = vmatpush1.bf16.msra.mxu0 %v200
      %224 = vmatprep.subr.bf16.mxu0 0
      %225 = vmatpush1.bf16.msra.mxu0 %v201
      %226 = vmatprep.subr.bf16.mxu0 0
      %227 = vmatpush1.bf16.msra.mxu0 0
      %228 = vmatprep.subr.bf16.mxu0 0
      %229 = vmatpush1.bf16.msra.mxu0 0
      %230 = vmatprep.subr.bf16.mxu0 0
      %231 = vmatpush1.bf16.msra.mxu0 0
      %232 = vmatprep.subr.bf16.mxu0 0
      %233 = vmatpush1.bf16.msra.mxu0 0
      %234 = vmatprep.subr.bf16.mxu0 0
      %235 = vmatpush1.bf16.msra.mxu0 0
      %236 = vmatprep.subr.bf16.mxu0 0
      %237 = vmatpush1.bf16.msra.mxu0 0
      %238 = vmatprep.subr.bf16.mxu0 0
      %239 = vmatpush1.bf16.msra.mxu0 0
      %240 = vmatprep.subr.bf16.mxu0 0
      %241 = vmatpush1.bf16.msra.mxu0 0
      %242 = vmatprep.mubr.bf16.mxu0 0
      %243 = vmatmul.mubr.bf16.gmra.mrb[0].mxu0 %v144
      %v244 = vpop.f32.mrb[0].mxu0
      %v245 = vadd.f32 0.0, %v244
      %v246 = vpop.f32.mrb[0].mxu0
      %v247 = vpop.f32.mrb[0].mxu0
      %v248 = vadd.f32 0.0, %v247
      %v249 = vpop.f32.mrb[0].mxu0
      %250 = vmatprep.mubr.bf16.mxu0 0
      %251 = vmatmul.mubr.bf16.gmra.mrb[0].mxu0 %v145
      %v252 = vpop.f32.mrb[0].mxu0
      %v253 = vadd.f32 0.0, %v252
      %v254 = vpop.f32.mrb[0].mxu0
      %v255 = vpop.f32.mrb[0].mxu0
      %v256 = vadd.f32 0.0, %v255
      %v257 = vpop.f32.mrb[0].mxu0
      %258 = vdwg.mxu0
      %v259 = vpack.c.bf16 %v248, %v245
      %v260 = vpack.c.bf16 %v256, %v253
      %v263 = vunpack.c.l.b16 %v259
      %v264 = vunpack.c.h.b16 %v259
      %v265 = vunpack.c.l.b16 %v260
      %v266 = vunpack.c.h.b16 %v260
      %v267 = vpack.c.b16 %v263, %v263
      %v268 = vpack.c.b16 %v264, %v264
      %v269 = vpack.c.b16 %v265, %v265
      %v270 = vpack.c.b16 %v266, %v266
      %275 = vst [vmem:[%s140] sm:$0xf] %v267
      %276 = vst [vmem:[%s140 + $0x4] sm:$0xf] %v268
      %277 = vst [vmem:[%s140 + $0x8] sm:$0xf] %v269
      %278 = vst [vmem:[%s140 + $0xc] sm:$0xf] %v270
      %s279 = smul.u32 4, %s13
      %p280 = scmp.lt.s32.totalorder %s279, 15
      %s281 = scalar_select %p280, %s279, 15
      %s282 = smul.addr %s281, 4
      %s283 = scalar_lea.vmem %s2, %s282
      // Predicated region
      $region29: #{_forward.7} parent=27 // pred_check
        %p284 = pneg %p78
      $region30: #{_forward.7} parent=27 // pred_check_branch
        %286 = sbr.rel (%p284) target = $region32
      $region31: #{_forward.7} parent=27 // pred_region
        %s287 = smul.u32 4, %s13
      $region32: #{_forward.7} parent=27 // pred_fallthru
        _
    $region28: #{_forward.7} parent=5 // pred_fallthru
      _
    %p288 = scmp.le.s32.totalorder 2, %s8
    // Predicated region
    $region33: #{_forward.7} parent=5 // pred_check
      %p289 = pneg %p288
    $region34: #{_forward.7} parent=5 // pred_check_branch
      %291 = sbr.rel (%p289) target = $region36
    $region35: #{_forward.7} parent=5 // pred_region
      %s292 = ssub.s32 %s8, 2
      // Predicated region
      $region37: #{_forward.7} parent=35 // pred_check
        %p293 = pneg %p84
      $region38: #{_forward.7} parent=35 // pred_check_branch
        %295 = sbr.rel (%p293) target = $region40
      $region39: #{_forward.7} parent=35 // pred_region
        %s296 = smul.u32 4, %s14
        %p297 = scmp.lt.s32.totalorder %s296, 15
        %s298 = scalar_select %p297, %s296, 15
        %s299 = smul.addr %s298, 4
        %s300 = scalar_lea.vmem %s2, %s299
      $region40: #{_forward.7} parent=35 // pred_fallthru
        _
    $region36: #{_forward.7} parent=5 // pred_fallthru
      _
  $region6: #{_forward.7} parent=0 // loop_footer
    %s12 = sadd.s32 1, %s8
  $region7: #{_forward.7} parent=0 // loop_footer_branch
    %7 = sbr.rel target = $region3
  $region8: #{_forward.7} parent=0 // loop_exit
    _

// kernel: _forward.8
$region0: #{_forward.8}
  #allocation0 [shape = 'u32[]', space=smem, size = 0x4, offset = 0x4, fixed_abs, tag = 'smem constant byte address 0x4 - core index']
  #allocation1 [shape = 'u32[144,128]{1,0:T(1,128)}', space=vmem, size = 0x12000, scoped, tag = 'internal scratch']
  %s0 = inlined_call_operand.vmem [shape: s8[128,128], index: 0, kind: input, shape index: {}]
  %s1 = inlined_call_operand.vmem [shape: s8[128,128], index: 1, kind: input, shape index: {}]
  %s2 = inlined_call_operand.vmem [shape: bf16[128,128], index: 2, kind: input, shape index: {}]
  %s3 = inlined_call_operand.vmem [shape: bf16[128,128], index: 3, kind: input, shape index: {}]
  %s4 = inlined_call_operand.vmem [shape: bf16[128,128], index: 4, kind: output, shape index: {}]
  %s5 = sld [smem:[#allocation0]]
  $region49: #{_forward.8} parent=0
    _
  %s7 = ssub.s32 1, %s5
  %s8 = scalar_select 0, %s7, %s5
  loop: start=0, step=1, limit=6
  $region2: #{_forward.8} parent=0 // loop_pre_header
    _
  $region3: #{_forward.8} parent=0 // loop_header
    %s10 = sphi 0, %s14
    %p11 = scmp.ge.s32.totalorder %s10, 6
    %s20 = sphi 0, %s22
    %s23 = sphi 0, %s20
    %s24 = sphi 0, %s23
    %s40 = sphi 0, %s24
    %s46 = sphi 0, %s48
    %s49 = sphi 0, %s46
    %s50 = sphi 0, %s49
    %s66 = sphi 0, %s50
    %s70 = sphi 0, %s70
    %s72 = sphi 0, %s70
    %s73 = sphi 0, %s72
    %s87 = sphi 0, %s73
    %s91 = sphi 0, %s91
    %s93 = sphi 0, %s91
    %s94 = sphi 0, %s93
    %s108 = sphi 0, %s94
    %s114 = sphi 0, %s116
    %s117 = sphi 0, %s114
    %s118 = sphi 0, %s117
    %s134 = sphi 0, %s118
  $region4: #{_forward.8} parent=0 // loop_header_branch
    %13 = sbr.rel (%p11) target = $region8
  $region5: #{_forward.8} parent=0 // loop_body
    %s15 = ssub.s32 %s10, 1
    %s16 = ssub.s32 %s10, 2
    %s17 = sadd.s32 %s10, 1
    %s18 = ssub.s32 %s10, %s17
    %p19 = scmp.eq.s32.totalorder %s18, 0
    %s21 = sadd.s32 %s20, 1
    %s22 = scalar_select %p19, %s20, %s21
    %p25 = pneg %p19
    %p26 = scmp.eq.s32.totalorder %s10, 3
    %p27 = por %p25, %p26
    %p28 = scmp.ne.s32.totalorder %s20, %s23
    %p29 = scmp.eq.s32.totalorder %s10, 0
    %p30 = por %p28, %p29
    %p31 = scmp.ne.s32.totalorder %s20, %s23
    %p32 = scmp.eq.s32.totalorder %s15, 3
    %p33 = por %p31, %p32
    %p34 = scmp.ne.s32.totalorder %s23, %s24
    %p35 = scmp.eq.s32.totalorder %s15, 0
    %p36 = por %p34, %p35
    %p37 = scmp.ne.s32.totalorder %s23, %s24
    %p38 = scmp.eq.s32.totalorder %s16, 3
    %p39 = por %p37, %p38
    %p41 = scmp.ne.s32.totalorder %s24, %s40
    %p42 = scmp.eq.s32.totalorder %s16, 0
    %p43 = por %p41, %p42
    %s44 = ssub.s32 %s10, %s17
    %p45 = scmp.eq.s32.totalorder %s44, 0
    %s47 = sadd.s32 %s46, 1
    %s48 = scalar_select %p45, %s46, %s47
    %p51 = pneg %p45
    %p52 = scmp.eq.s32.totalorder %s10, 3
    %p53 = por %p51, %p52
    %p54 = scmp.ne.s32.totalorder %s46, %s49
    %p55 = scmp.eq.s32.totalorder %s10, 0
    %p56 = por %p54, %p55
    %p57 = scmp.ne.s32.totalorder %s46, %s49
    %p58 = scmp.eq.s32.totalorder %s15, 3
    %p59 = por %p57, %p58
    %p60 = scmp.ne.s32.totalorder %s49, %s50
    %p61 = scmp.eq.s32.totalorder %s15, 0
    %p62 = por %p60, %p61
    %p63 = scmp.ne.s32.totalorder %s49, %s50
    %p64 = scmp.eq.s32.totalorder %s16, 3
    %p65 = por %p63, %p64
    %p67 = scmp.ne.s32.totalorder %s50, %s66
    %p68 = scmp.eq.s32.totalorder %s16, 0
    %p69 = por %p67, %p68
    %s71 = sadd.s32 %s70, 1
    %p74 = scmp.eq.s32.totalorder %s10, 3
    %p75 = scmp.ne.s32.totalorder %s70, %s72
    %p76 = scmp.eq.s32.totalorder %s10, 0
    %p77 = por %p75, %p76
    %p78 = scmp.ne.s32.totalorder %s70, %s72
    %p79 = scmp.eq.s32.totalorder %s15, 3
    %p80 = por %p78, %p79
    %p81 = scmp.ne.s32.totalorder %s72, %s73
    %p82 = scmp.eq.s32.totalorder %s15, 0
    %p83 = por %p81, %p82
    %p84 = scmp.ne.s32.totalorder %s72, %s73
    %p85 = scmp.eq.s32.totalorder %s16, 3
    %p86 = por %p84, %p85
    %p88 = scmp.ne.s32.totalorder %s73, %s87
    %p89 = scmp.eq.s32.totalorder %s16, 0
    %p90 = por %p88, %p89
    %s92 = sadd.s32 %s91, 1
    %p95 = scmp.eq.s32.totalorder %s10, 3
    %p96 = scmp.ne.s32.totalorder %s91, %s93
    %p97 = scmp.eq.s32.totalorder %s10, 0
    %p98 = por %p96, %p97
    %p99 = scmp.ne.s32.totalorder %s91, %s93
    %p100 = scmp.eq.s32.totalorder %s15, 3
    %p101 = por %p99, %p100
    %p102 = scmp.ne.s32.totalorder %s93, %s94
    %p103 = scmp.eq.s32.totalorder %s15, 0
    %p104 = por %p102, %p103
    %p105 = scmp.ne.s32.totalorder %s93, %s94
    %p106 = scmp.eq.s32.totalorder %s16, 3
    %p107 = por %p105, %p106
    %p109 = scmp.ne.s32.totalorder %s94, %s108
    %p110 = scmp.eq.s32.totalorder %s16, 0
    %p111 = por %p109, %p110
    %s112 = ssub.s32 %s10, %s17
    %p113 = scmp.eq.s32.totalorder %s112, 0
    %s115 = sadd.s32 %s114, 1
    %s116 = scalar_select %p113, %s114, %s115
    %p119 = pneg %p113
    %p120 = scmp.eq.s32.totalorder %s10, 3
    %p121 = por %p119, %p120
    %p122 = scmp.ne.s32.totalorder %s114, %s117
    %p123 = scmp.eq.s32.totalorder %s10, 0
    %p124 = por %p122, %p123
    %p125 = scmp.ne.s32.totalorder %s114, %s117
    %p126 = scmp.eq.s32.totalorder %s15, 3
    %p127 = por %p125, %p126
    %p128 = scmp.ne.s32.totalorder %s117, %s118
    %p129 = scmp.eq.s32.totalorder %s15, 0
    %p130 = por %p128, %p129
    %p131 = scmp.ne.s32.totalorder %s117, %s118
    %p132 = scmp.eq.s32.totalorder %s16, 3
    %p133 = por %p131, %p132
    %p135 = scmp.ne.s32.totalorder %s118, %s134
    %p136 = scmp.eq.s32.totalorder %s16, 0
    %p137 = por %p135, %p136
    %p138 = scmp.le.s32.totalorder 1, %s10
    %p139 = scmp.lt.s32.totalorder %s10, 5
    %p140 = pnand %p138, %p139
    %p141 = pneg %p140
    // Predicated region
    $region9: #{_forward.8} parent=5 // pred_check
      _
    $region10: #{_forward.8} parent=5 // pred_check_branch
      %143 = sbr.rel (%p140) target = $region12
    $region11: #{_forward.8} parent=5 // pred_region
      %s144 = ssub.s32 %s10, 1
      // Predicated region
      $region13: #{_forward.8} parent=11 // pred_check
        %p145 = pneg %p83
      $region14: #{_forward.8} parent=11 // pred_check_branch
        %147 = sbr.rel (%p145) target = $region16
      $region15: #{_forward.8} parent=11 // pred_region
        _
      $region16: #{_forward.8} parent=11 // pred_fallthru
        _
      // Predicated region
      $region17: #{_forward.8} parent=11 // pred_check
        %p148 = pneg %p104
      $region18: #{_forward.8} parent=11 // pred_check_branch
        %150 = sbr.rel (%p148) target = $region20
      $region19: #{_forward.8} parent=11 // pred_region
        _
      $region20: #{_forward.8} parent=11 // pred_fallthru
        _
    $region12: #{_forward.8} parent=5 // pred_fallthru
      _
    %p151 = scmp.lt.s32.totalorder %s10, 4
    // Predicated region
    $region21: #{_forward.8} parent=5 // pred_check
      %p152 = pneg %p151
    $region22: #{_forward.8} parent=5 // pred_check_branch
      %154 = sbr.rel (%p152) target = $region24
    $region23: #{_forward.8} parent=5 // pred_region
      // Predicated region
      $region25: #{_forward.8} parent=23 // pred_check
        %p155 = pneg %p30
      $region26: #{_forward.8} parent=23 // pred_check_branch
        %157 = sbr.rel (%p155) target = $region28
      $region27: #{_forward.8} parent=23 // pred_region
        %p158 = scmp.lt.s32.totalorder %s10, 3
        %s159 = scalar_select %p158, %s10, 3
        %s160 = smul.addr %s159, 8
        %s161 = scalar_lea.vmem %s0, %s160
      $region28: #{_forward.8} parent=23 // pred_fallthru
        _
      // Predicated region
      $region29: #{_forward.8} parent=23 // pred_check
        %p162 = pneg %p56
      $region30: #{_forward.8} parent=23 // pred_check_branch
        %164 = sbr.rel (%p162) target = $region32
      $region31: #{_forward.8} parent=23 // pred_region
        %p165 = scmp.lt.s32.totalorder %s10, 3
        %s166 = scalar_select %p165, %s10, 3
        %s167 = smul.addr %s166, 8
        %s168 = scalar_lea.vmem %s1, %s167
      $region32: #{_forward.8} parent=23 // pred_fallthru
        _
    $region24: #{_forward.8} parent=5 // pred_fallthru
      _
    %p169 = scmp.le.s32.totalorder 1, %s10
    %p170 = scmp.lt.s32.totalorder %s10, 5
    %p171 = pnand %p169, %p170
    %p172 = pneg %p171
    // Predicated region
    $region33: #{_forward.8} parent=5 // pred_check
      _
    $region34: #{_forward.8} parent=5 // pred_check_branch
      %174 = sbr.rel (%p171) target = $region36
    $region35: #{_forward.8} parent=5 // pred_region
      %s175 = ssub.s32 %s10, 1
      %p176 = scmp.lt.s32.totalorder %s15, 3
      %s177 = scalar_select %p176, %s15, 3
      %s178 = smul.addr %s177, 8
      %s179 = scalar_lea.vmem %s0, %s178
      %p180 = pneg %p36
      %p181 = pneg %p33
      %p182 = scmp.lt.s32.totalorder %s15, 3
      %s183 = scalar_select %p182, %s15, 3
      %s184 = smul.addr %s183, 8
      %s185 = scalar_lea.vmem %s1, %s184
      %p186 = pneg %p62
      %p187 = pneg %p59
      %p188 = pneg %p83
      %p189 = pneg %p80
      %p190 = pneg %p104
      %p191 = pneg %p101
      %p192 = pneg %p130
      %p193 = pneg %p127
      %s194 = smul.u32 4, %s15
      %p195 = scmp.lt.s32.totalorder %s194, 15
      %s196 = scalar_select %p195, %s194, 15
      %s197 = smul.addr %s196, 4
      %s198 = scalar_lea.vmem %s4, %s197
      %p199 = scmp.lt.s32.totalorder %s15, 3
      %s200 = scalar_select %p199, %s15, 3
      %s201 = smul.addr %s200, 8
      %s202 = scalar_lea.vmem %s0, %s201
      %p203 = scmp.lt.s32.totalorder %s15, 3
      %s204 = scalar_select %p203, %s15, 3
      %s205 = smul.addr %s204, 8
      %s206 = scalar_lea.vmem %s1, %s205
      %s207 = smul.u32 4, %s15
      %p208 = scmp.lt.s32.totalorder %s207, 15
      %s209 = scalar_select %p208, %s207, 15
      %s210 = smul.addr %s209, 4
      %s211 = scalar_lea.vmem %s4, %s210
      %s212 = smul.u32 4, %s15
      %v214 = vld [vmem:[%s202] sm:$0xff]
      %v215 = vunpack.c.l.s8.bf16 %v214
      %v216 = vunpack.c.h.s8.bf16 %v214
      %v217 = vld [vmem:[%s206] sm:$0xff]
      %v218 = vunpack.c.l.s8.bf16 %v217
      %v219 = vunpack.c.h.s8.bf16 %v217
      %v220 = vld [vmem:[%s2] sm:$0xf]
      %v221 = vld [vmem:[%s2 + $0x4] sm:$0xf]
      %v222 = vld [vmem:[%s2 + $0x8] sm:$0xf]
      %v223 = vld [vmem:[%s2 + $0xc] sm:$0xf]
      %v224 = vld [vmem:[%s2 + $0x10] sm:$0xf]
      %v225 = vld [vmem:[%s2 + $0x14] sm:$0xf]
      %v226 = vld [vmem:[%s2 + $0x18] sm:$0xf]
      %v227 = vld [vmem:[%s2 + $0x1c] sm:$0xf]
      %v228 = vld [vmem:[%s2 + $0x20] sm:$0xf]
      %v229 = vld [vmem:[%s2 + $0x24] sm:$0xf]
      %v230 = vld [vmem:[%s2 + $0x28] sm:$0xf]
      %v231 = vld [vmem:[%s2 + $0x2c] sm:$0xf]
      %v232 = vld [vmem:[%s2 + $0x30] sm:$0xf]
      %v233 = vld [vmem:[%s2 + $0x34] sm:$0xf]
      %v234 = vld [vmem:[%s2 + $0x38] sm:$0xf]
      %v235 = vld [vmem:[%s2 + $0x3c] sm:$0xf]
      %v236 = vld [vmem:[%s3] sm:$0xf]
      %v237 = vld [vmem:[%s3 + $0x4] sm:$0xf]
      %v238 = vld [vmem:[%s3 + $0x8] sm:$0xf]
      %v239 = vld [vmem:[%s3 + $0xc] sm:$0xf]
      %v240 = vld [vmem:[%s3 + $0x10] sm:$0xf]
      %v241 = vld [vmem:[%s3 + $0x14] sm:$0xf]
      %v242 = vld [vmem:[%s3 + $0x18] sm:$0xf]
      %v243 = vld [vmem:[%s3 + $0x1c] sm:$0xf]
      %v244 = vld [vmem:[%s3 + $0x20] sm:$0xf]
      %v245 = vld [vmem:[%s3 + $0x24] sm:$0xf]
      %v246 = vld [vmem:[%s3 + $0x28] sm:$0xf]
      %v247 = vld [vmem:[%s3 + $0x2c] sm:$0xf]
      %v248 = vld [vmem:[%s3 + $0x30] sm:$0xf]
      %v249 = vld [vmem:[%s3 + $0x34] sm:$0xf]
      %v250 = vld [vmem:[%s3 + $0x38] sm:$0xf]
      %v251 = vld [vmem:[%s3 + $0x3c] sm:$0xf]
      %v268 = vunpack.c.l.b16 %v236
      %v269 = vunpack.c.l.b16 %v237
      %v270 = vunpack.c.l.b16 %v238
      %v271 = vunpack.c.l.b16 %v239
      %v272 = vunpack.c.l.b16 %v240
      %v273 = vunpack.c.l.b16 %v241
      %v274 = vunpack.c.l.b16 %v242
      %v275 = vunpack.c.l.b16 %v243
      %v276 = vunpack.c.l.b16 %v244
      %v277 = vunpack.c.l.b16 %v245
      %v278 = vunpack.c.l.b16 %v246
      %v279 = vunpack.c.l.b16 %v247
      %v280 = vunpack.c.l.b16 %v248
      %v281 = vunpack.c.l.b16 %v249
      %v282 = vunpack.c.l.b16 %v250
      %v283 = vunpack.c.l.b16 %v251
      %v284 = vpack.c.b16 %v269, %v268
      %v285 = vpack.c.b16 %v271, %v270
      %v286 = vpack.c.b16 %v273, %v272
      %v287 = vpack.c.b16 %v275, %v274
      %v288 = vpack.c.b16 %v277, %v276
      %v289 = vpack.c.b16 %v279, %v278
      %v290 = vpack.c.b16 %v281, %v280
      %v291 = vpack.c.b16 %v283, %v282
      %300 = vmatprep.subr.bf16.mxu0 0
      %301 = vmatpush1.bf16.msra.mxu0 %v284
      %302 = vmatprep.subr.bf16.mxu0 0
      %303 = vmatpush1.bf16.msra.mxu0 %v285
      %304 = vmatprep.subr.bf16.mxu0 0
      %305 = vmatpush1.bf16.msra.mxu0 %v286
      %306 = vmatprep.subr.bf16.mxu0 0
      %307 = vmatpush1.bf16.msra.mxu0 %v287
      %308 = vmatprep.subr.bf16.mxu0 0
      %309 = vmatpush1.bf16.msra.mxu0 %v288
      %310 = vmatprep.subr.bf16.mxu0 0
      %311 = vmatpush1.bf16.msra.mxu0 %v289
      %312 = vmatprep.subr.bf16.mxu0 0
      %313 = vmatpush1.bf16.msra.mxu0 %v290
      %314 = vmatprep.subr.bf16.mxu0 0
      %315 = vmatpush1.bf16.msra.mxu0 %v291
      %316 = vmatprep.subr.bf16.mxu0 0
      %317 = vmatpush1.bf16.msra.mxu0 0
      %318 = vmatprep.subr.bf16.mxu0 0
      %319 = vmatpush1.bf16.msra.mxu0 0
      %320 = vmatprep.subr.bf16.mxu0 0
      %321 = vmatpush1.bf16.msra.mxu0 0
      %322 = vmatprep.subr.bf16.mxu0 0
      %323 = vmatpush1.bf16.msra.mxu0 0
      %324 = vmatprep.subr.bf16.mxu0 0
      %325 = vmatpush1.bf16.msra.mxu0 0
      %326 = vmatprep.subr.bf16.mxu0 0
      %327 = vmatpush1.bf16.msra.mxu0 0
      %328 = vmatprep.subr.bf16.mxu0 0
      %329 = vmatpush1.bf16.msra.mxu0 0
      %330 = vmatprep.subr.bf16.mxu0 0
      %331 = vmatpush1.bf16.msra.mxu0 0
      %332 = vmatprep.mubr.bf16.mxu0 0
      %333 = vmatmul.mubr.bf16.gmra.mrb[0].mxu0 %v218
      %v334 = vpop.f32.mrb[0].mxu0
      %v335 = vadd.f32 0.0, %v334
      %v336 = vpop.f32.mrb[0].mxu0
      %v337 = vpop.f32.mrb[0].mxu0
      %v338 = vadd.f32 0.0, %v337
      %v339 = vpop.f32.mrb[0].mxu0
      %340 = vmatprep.mubr.bf16.mxu0 0
      %341 = vmatmul.mubr.bf16.gmra.mrb[0].mxu0 %v219
      %v342 = vpop.f32.mrb[0].mxu0
      %v343 = vadd.f32 0.0, %v342
      %v344 = vpop.f32.mrb[0].mxu0
      %v345 = vpop.f32.mrb[0].mxu0
      %v346 = vadd.f32 0.0, %v345
      %v347 = vpop.f32.mrb[0].mxu0
      %348 = vdwg.mxu0
      %v365 = vunpack.c.l.b16 %v220
      %v366 = vunpack.c.l.b16 %v221
      %v367 = vunpack.c.l.b16 %v222
      %v368 = vunpack.c.l.b16 %v223
      %v369 = vunpack.c.l.b16 %v224
      %v370 = vunpack.c.l.b16 %v225
      %v371 = vunpack.c.l.b16 %v226
      %v372 = vunpack.c.l.b16 %v227
      %v373 = vunpack.c.l.b16 %v228
      %v374 = vunpack.c.l.b16 %v229
      %v375 = vunpack.c.l.b16 %v230
      %v376 = vunpack.c.l.b16 %v231
      %v377 = vunpack.c.l.b16 %v232
      %v378 = vunpack.c.l.b16 %v233
      %v379 = vunpack.c.l.b16 %v234
      %v380 = vunpack.c.l.b16 %v235
      %v381 = vpack.c.b16 %v366, %v365
      %v382 = vpack.c.b16 %v368, %v367
      %v383 = vpack.c.b16 %v370, %v369
      %v384 = vpack.c.b16 %v372, %v371
      %v385 = vpack.c.b16 %v374, %v373
      %v386 = vpack.c.b16 %v376, %v375
      %v387 = vpack.c.b16 %v378, %v377
      %v388 = vpack.c.b16 %v380, %v379
      %397 = vmatprep.subr.bf16.mxu0 0
      %398 = vmatpush1.bf16.msra.mxu0 %v381
      %399 = vmatprep.subr.bf16.mxu0 0
      %400 = vmatpush1.bf16.msra.mxu0 %v382
      %401 = vmatprep.subr.bf16.mxu0 0
      %402 = vmatpush1.bf16.msra.mxu0 %v383
      %403 = vmatprep.subr.bf16.mxu0 0
      %404 = vmatpush1.bf16.msra.mxu0 %v384
      %405 = vmatprep.subr.bf16.mxu0 0
      %406 = vmatpush1.bf16.msra.mxu0 %v385
      %407 = vmatprep.subr.bf16.mxu0 0
      %408 = vmatpush1.bf16.msra.mxu0 %v386
      %409 = vmatprep.subr.bf16.mxu0 0
      %410 = vmatpush1.bf16.msra.mxu0 %v387
      %411 = vmatprep.subr.bf16.mxu0 0
      %412 = vmatpush1.bf16.msra.mxu0 %v388
      %413 = vmatprep.subr.bf16.mxu0 0
      %414 = vmatpush1.bf16.msra.mxu0 0
      %415 = vmatprep.subr.bf16.mxu0 0
      %416 = vmatpush1.bf16.msra.mxu0 0
      %417 = vmatprep.subr.bf16.mxu0 0
      %418 = vmatpush1.bf16.msra.mxu0 0
      %419 = vmatprep.subr.bf16.mxu0 0
      %420 = vmatpush1.bf16.msra.mxu0 0
      %421 = vmatprep.subr.bf16.mxu0 0
      %422 = vmatpush1.bf16.msra.mxu0 0
      %423 = vmatprep.subr.bf16.mxu0 0
      %424 = vmatpush1.bf16.msra.mxu0 0
      %425 = vmatprep.subr.bf16.mxu0 0
      %426 = vmatpush1.bf16.msra.mxu0 0
      %427 = vmatprep.subr.bf16.mxu0 0
      %428 = vmatpush1.bf16.msra.mxu0 0
      %429 = vmatprep.mubr.bf16.mxu0 0
      %430 = vmatmul.mubr.bf16.gmra.mrb[0].mxu0 %v215
      %v431 = vpop.f32.mrb[0].mxu0
      %v432 = vadd.f32 %v335, %v431
      %v433 = vpop.f32.mrb[0].mxu0
      %v434 = vpop.f32.mrb[0].mxu0
      %v435 = vadd.f32 %v338, %v434
      %v436 = vpop.f32.mrb[0].mxu0
      %437 = vmatprep.mubr.bf16.mxu0 0
      %438 = vmatmul.mubr.bf16.gmra.mrb[0].mxu0 %v216
      %v439 = vpop.f32.mrb[0].mxu0
      %v440 = vadd.f32 %v343, %v439
      %v441 = vpop.f32.mrb[0].mxu0
      %v442 = vpop.f32.mrb[0].mxu0
      %v443 = vadd.f32 %v346, %v442
      %v444 = vpop.f32.mrb[0].mxu0
      %445 = vdwg.mxu0
      %v446 = vmax.f32 %v432, 0.0
      %v447 = vmax.f32 %v435, 0.0
      %v448 = vmax.f32 %v440, 0.0
      %v449 = vmax.f32 %v443, 0.0
      %v450 = vpack.c.bf16 %v447, %v446
      %v451 = vpack.c.bf16 %v449, %v448
      %v454 = vunpack.c.l.b16 %v450
      %v455 = vunpack.c.h.b16 %v450
      %v456 = vunpack.c.l.b16 %v451
      %v457 = vunpack.c.h.b16 %v451
      %v458 = vpack.c.b16 %v454, %v454
      %v459 = vpack.c.b16 %v455, %v455
      %v460 = vpack.c.b16 %v456, %v456
      %v461 = vpack.c.b16 %v457, %v457
      %466 = vst [vmem:[%s211] sm:$0xf] %v458
      %467 = vst [vmem:[%s211 + $0x4] sm:$0xf] %v459
      %468 = vst [vmem:[%s211 + $0x8] sm:$0xf] %v460
      %469 = vst [vmem:[%s211 + $0xc] sm:$0xf] %v461
      %s470 = smul.u32 4, %s15
      %p471 = scmp.lt.s32.totalorder %s470, 15
      %s472 = scalar_select %p471, %s470, 15
      %s473 = smul.addr %s472, 4
      %s474 = scalar_lea.vmem %s4, %s473
      // Predicated region
      $region37: #{_forward.8} parent=35 // pred_check
        %p475 = pneg %p127
      $region38: #{_forward.8} parent=35 // pred_check_branch
        %477 = sbr.rel (%p475) target = $region40
      $region39: #{_forward.8} parent=35 // pred_region
        %s478 = smul.u32 4, %s15
      $region40: #{_forward.8} parent=35 // pred_fallthru
        _
    $region36: #{_forward.8} parent=5 // pred_fallthru
      _
    %p479 = scmp.le.s32.totalorder 2, %s10
    // Predicated region
    $region41: #{_forward.8} parent=5 // pred_check
      %p480 = pneg %p479
    $region42: #{_forward.8} parent=5 // pred_check_branch
      %482 = sbr.rel (%p480) target = $region44
    $region43: #{_forward.8} parent=5 // pred_region
      %s483 = ssub.s32 %s10, 2
      // Predicated region
      $region45: #{_forward.8} parent=43 // pred_check
        %p484 = pneg %p133
      $region46: #{_forward.8} parent=43 // pred_check_branch
        %486 = sbr.rel (%p484) target = $region48
      $region47: #{_forward.8} parent=43 // pred_region
        %s487 = smul.u32 4, %s16
        %p488 = scmp.lt.s32.totalorder %s487, 15
        %s489 = scalar_select %p488, %s487, 15
        %s490 = smul.addr %s489, 4
        %s491 = scalar_lea.vmem %s4, %s490
      $region48: #{_forward.8} parent=43 // pred_fallthru
        _
    $region44: #{_forward.8} parent=5 // pred_fallthru
      _
  $region6: #{_forward.8} parent=0 // loop_footer
    %s14 = sadd.s32 1, %s10
  $region7: #{_forward.8} parent=0 // loop_footer_branch
    %9 = sbr.rel target = $region3
  $region8: #{_forward.8} parent=0 // loop_exit
    _

// kernel: _forward.9
$region0: #{_forward.9}
  #allocation0 [shape = 'u32[]', space=smem, size = 0x4, offset = 0x4, fixed_abs, tag = 'smem constant byte address 0x4 - core index']
  #allocation1 [shape = 'u32[144,128]{1,0:T(1,128)}', space=vmem, size = 0x12000, scoped, tag = 'internal scratch']
  %s0 = inlined_call_operand.vmem [shape: bf16[128,128], index: 0, kind: input, shape index: {}]
  %s1 = inlined_call_operand.vmem [shape: f32[128,128], index: 1, kind: input, shape index: {}]
  %s2 = inlined_call_operand.vmem [shape: f32[1,128], index: 2, kind: input, shape index: {}]
  %s3 = inlined_call_operand.vmem [shape: bf16[128,128], index: 3, kind: output, shape index: {}]
  %s4 = sld [smem:[#allocation0]]
  $region45: #{_forward.9} parent=0
    _
  %s6 = ssub.s32 1, %s4
  %s7 = scalar_select 0, %s6, %s4
  loop: start=0, step=1, limit=6
  $region2: #{_forward.9} parent=0 // loop_pre_header
    _
  $region3: #{_forward.9} parent=0 // loop_header
    %s9 = sphi 0, %s13
    %p10 = scmp.ge.s32.totalorder %s9, 6
    %s19 = sphi 0, %s21
    %s22 = sphi 0, %s19
    %s23 = sphi 0, %s22
    %s39 = sphi 0, %s23
    %s43 = sphi 0, %s43
    %s45 = sphi 0, %s43
    %s46 = sphi 0, %s45
    %s60 = sphi 0, %s46
    %s64 = sphi 0, %s64
    %s66 = sphi 0, %s64
    %s67 = sphi 0, %s66
    %s81 = sphi 0, %s67
    %s87 = sphi 0, %s89
    %s90 = sphi 0, %s87
    %s91 = sphi 0, %s90
    %s107 = sphi 0, %s91
  $region4: #{_forward.9} parent=0 // loop_header_branch
    %12 = sbr.rel (%p10) target = $region8
  $region5: #{_forward.9} parent=0 // loop_body
    %s14 = ssub.s32 %s9, 1
    %s15 = ssub.s32 %s9, 2
    %s16 = sadd.s32 %s9, 1
    %s17 = ssub.s32 %s9, %s16
    %p18 = scmp.eq.s32.totalorder %s17, 0
    %s20 = sadd.s32 %s19, 1
    %s21 = scalar_select %p18, %s19, %s20
    %p24 = pneg %p18
    %p25 = scmp.eq.s32.totalorder %s9, 3
    %p26 = por %p24, %p25
    %p27 = scmp.ne.s32.totalorder %s19, %s22
    %p28 = scmp.eq.s32.totalorder %s9, 0
    %p29 = por %p27, %p28
    %p30 = scmp.ne.s32.totalorder %s19, %s22
    %p31 = scmp.eq.s32.totalorder %s14, 3
    %p32 = por %p30, %p31
    %p33 = scmp.ne.s32.totalorder %s22, %s23
    %p34 = scmp.eq.s32.totalorder %s14, 0
    %p35 = por %p33, %p34
    %p36 = scmp.ne.s32.totalorder %s22, %s23
    %p37 = scmp.eq.s32.totalorder %s15, 3
    %p38 = por %p36, %p37
    %p40 = scmp.ne.s32.totalorder %s23, %s39
    %p41 = scmp.eq.s32.totalorder %s15, 0
    %p42 = por %p40, %p41
    %s44 = sadd.s32 %s43, 1
    %p47 = scmp.eq.s32.totalorder %s9, 3
    %p48 = scmp.ne.s32.totalorder %s43, %s45
    %p49 = scmp.eq.s32.totalorder %s9, 0
    %p50 = por %p48, %p49
    %p51 = scmp.ne.s32.totalorder %s43, %s45
    %p52 = scmp.eq.s32.totalorder %s14, 3
    %p53 = por %p51, %p52
    %p54 = scmp.ne.s32.totalorder %s45, %s46
    %p55 = scmp.eq.s32.totalorder %s14, 0
    %p56 = por %p54, %p55
    %p57 = scmp.ne.s32.totalorder %s45, %s46
    %p58 = scmp.eq.s32.totalorder %s15, 3
    %p59 = por %p57, %p58
    %p61 = scmp.ne.s32.totalorder %s46, %s60
    %p62 = scmp.eq.s32.totalorder %s15, 0
    %p63 = por %p61, %p62
    %s65 = sadd.s32 %s64, 1
    %p68 = scmp.eq.s32.totalorder %s9, 3
    %p69 = scmp.ne.s32.totalorder %s64, %s66
    %p70 = scmp.eq.s32.totalorder %s9, 0
    %p71 = por %p69, %p70
    %p72 = scmp.ne.s32.totalorder %s64, %s66
    %p73 = scmp.eq.s32.totalorder %s14, 3
    %p74 = por %p72, %p73
    %p75 = scmp.ne.s32.totalorder %s66, %s67
    %p76 = scmp.eq.s32.totalorder %s14, 0
    %p77 = por %p75, %p76
    %p78 = scmp.ne.s32.totalorder %s66, %s67
    %p79 = scmp.eq.s32.totalorder %s15, 3
    %p80 = por %p78, %p79
    %p82 = scmp.ne.s32.totalorder %s67, %s81
    %p83 = scmp.eq.s32.totalorder %s15, 0
    %p84 = por %p82, %p83
    %s85 = ssub.s32 %s9, %s16
    %p86 = scmp.eq.s32.totalorder %s85, 0
    %s88 = sadd.s32 %s87, 1
    %s89 = scalar_select %p86, %s87, %s88
    %p92 = pneg %p86
    %p93 = scmp.eq.s32.totalorder %s9, 3
    %p94 = por %p92, %p93
    %p95 = scmp.ne.s32.totalorder %s87, %s90
    %p96 = scmp.eq.s32.totalorder %s9, 0
    %p97 = por %p95, %p96
    %p98 = scmp.ne.s32.totalorder %s87, %s90
    %p99 = scmp.eq.s32.totalorder %s14, 3
    %p100 = por %p98, %p99
    %p101 = scmp.ne.s32.totalorder %s90, %s91
    %p102 = scmp.eq.s32.totalorder %s14, 0
    %p103 = por %p101, %p102
    %p104 = scmp.ne.s32.totalorder %s90, %s91
    %p105 = scmp.eq.s32.totalorder %s15, 3
    %p106 = por %p104, %p105
    %p108 = scmp.ne.s32.totalorder %s91, %s107
    %p109 = scmp.eq.s32.totalorder %s15, 0
    %p110 = por %p108, %p109
    %p111 = scmp.le.s32.totalorder 1, %s9
    %p112 = scmp.lt.s32.totalorder %s9, 5
    %p113 = pnand %p111, %p112
    %p114 = pneg %p113
    // Predicated region
    $region9: #{_forward.9} parent=5 // pred_check
      _
    $region10: #{_forward.9} parent=5 // pred_check_branch
      %116 = sbr.rel (%p113) target = $region12
    $region11: #{_forward.9} parent=5 // pred_region
      %s117 = ssub.s32 %s9, 1
      // Predicated region
      $region13: #{_forward.9} parent=11 // pred_check
        %p118 = pneg %p56
      $region14: #{_forward.9} parent=11 // pred_check_branch
        %120 = sbr.rel (%p118) target = $region16
      $region15: #{_forward.9} parent=11 // pred_region
        _
      $region16: #{_forward.9} parent=11 // pred_fallthru
        _
      // Predicated region
      $region17: #{_forward.9} parent=11 // pred_check
        %p121 = pneg %p77
      $region18: #{_forward.9} parent=11 // pred_check_branch
        %123 = sbr.rel (%p121) target = $region20
      $region19: #{_forward.9} parent=11 // pred_region
        _
      $region20: #{_forward.9} parent=11 // pred_fallthru
        _
    $region12: #{_forward.9} parent=5 // pred_fallthru
      _
    %p124 = scmp.lt.s32.totalorder %s9, 4
    // Predicated region
    $region21: #{_forward.9} parent=5 // pred_check
      %p125 = pneg %p124
    $region22: #{_forward.9} parent=5 // pred_check_branch
      %127 = sbr.rel (%p125) target = $region24
    $region23: #{_forward.9} parent=5 // pred_region
      // Predicated region
      $region25: #{_forward.9} parent=23 // pred_check
        %p128 = pneg %p29
      $region26: #{_forward.9} parent=23 // pred_check_branch
        %130 = sbr.rel (%p128) target = $region28
      $region27: #{_forward.9} parent=23 // pred_region
        %s131 = smul.u32 4, %s9
        %p132 = scmp.lt.s32.totalorder %s131, 15
        %s133 = scalar_select %p132, %s131, 15
        %s134 = smul.addr %s133, 4
        %s135 = scalar_lea.vmem %s0, %s134
        %s136 = smul.u32 4, %s9
      $region28: #{_forward.9} parent=23 // pred_fallthru
        _
    $region24: #{_forward.9} parent=5 // pred_fallthru
      _
    %p137 = scmp.le.s32.totalorder 1, %s9
    %p138 = scmp.lt.s32.totalorder %s9, 5
    %p139 = pnand %p137, %p138
    %p140 = pneg %p139
    // Predicated region
    $region29: #{_forward.9} parent=5 // pred_check
      _
    $region30: #{_forward.9} parent=5 // pred_check_branch
      %142 = sbr.rel (%p139) target = $region32
    $region31: #{_forward.9} parent=5 // pred_region
      %s143 = ssub.s32 %s9, 1
      %s144 = smul.u32 4, %s14
      %p145 = scmp.lt.s32.totalorder %s144, 15
      %s146 = scalar_select %p145, %s144, 15
      %s147 = smul.addr %s146, 4
      %s148 = scalar_lea.vmem %s0, %s147
      %p149 = pneg %p35
      %p150 = pneg %p32
      %p151 = pneg %p56
      %p152 = pneg %p53
      %p153 = pneg %p77
      %p154 = pneg %p74
      %p155 = pneg %p103
      %p156 = pneg %p100
      %s157 = smul.u32 4, %s14
      %p158 = scmp.lt.s32.totalorder %s157, 15
      %s159 = scalar_select %p158, %s157, 15
      %s160 = smul.addr %s159, 4
      %s161 = scalar_lea.vmem %s3, %s160
      %s162 = smul.u32 4, %s14
      %p163 = scmp.lt.s32.totalorder %s162, 15
      %s164 = scalar_select %p163, %s162, 15
      %s165 = smul.addr %s164, 4
      %s166 = scalar_lea.vmem %s0, %s165
      %s167 = smul.u32 4, %s14
      %s168 = smul.u32 4, %s14
      %p169 = scmp.lt.s32.totalorder %s168, 15
      %s170 = scalar_select %p169, %s168, 15
      %s171 = smul.addr %s170, 4
      %s172 = scalar_lea.vmem %s3, %s171
      %s173 = smul.u32 4, %s14
      %v174 = vld [vmem:[%s166] sm:$0xf]
      %v175 = vld [vmem:[%s166 + $0x4] sm:$0xf]
      %v176 = vld [vmem:[%s166 + $0x8] sm:$0xf]
      %v177 = vld [vmem:[%s166 + $0xc] sm:$0xf]
      %v178 = vunpack.c.l.bf16 %v174
      %v179 = vunpack.c.l.bf16 %v175
      %v180 = vunpack.c.l.bf16 %v176
      %v181 = vunpack.c.l.bf16 %v177
      %v182 = vld [vmem:[%s1] sm:$0xff]
      %v183 = vld [vmem:[%s1 + $0x8] sm:$0xff]
      %v184 = vld [vmem:[%s1 + $0x10] sm:$0xff]
      %v185 = vld [vmem:[%s1 + $0x18] sm:$0xff]
      %v186 = vld [vmem:[%s1 + $0x20] sm:$0xff]
      %v187 = vld [vmem:[%s1 + $0x28] sm:$0xff]
      %v188 = vld [vmem:[%s1 + $0x30] sm:$0xff]
      %v189 = vld [vmem:[%s1 + $0x38] sm:$0xff]
      %v190 = vld [vmem:[%s1 + $0x40] sm:$0xff]
      %v191 = vld [vmem:[%s1 + $0x48] sm:$0xff]
      %v192 = vld [vmem:[%s1 + $0x50] sm:$0xff]
      %v193 = vld [vmem:[%s1 + $0x58] sm:$0xff]
      %v194 = vld [vmem:[%s1 + $0x60] sm:$0xff]
      %v195 = vld [vmem:[%s1 + $0x68] sm:$0xff]
      %v196 = vld [vmem:[%s1 + $0x70] sm:$0xff]
      %v197 = vld [vmem:[%s1 + $0x78] sm:$0xff]
      %v198 = vld [vmem:[%s2] sm:$0x1]
      %v200 = vlaneseq
      %v201 = vshrl.u32 %v200, 7
      %v202 = vsub.s32 0, %v201
      %v203 = vrot.slane %v198, %v202
      %205 = vmatprep.subr.mxu0 0.0
      %206 = vmatpush1.msra.mxu0 %v182
      %207 = vmatprep.subr.mxu0 0.0
      %208 = vmatpush1.msra.mxu0 %v183
      %209 = vmatprep.subr.mxu0 0.0
      %210 = vmatpush1.msra.mxu0 %v184
      %211 = vmatprep.subr.mxu0 0.0
      %212 = vmatpush1.msra.mxu0 %v185
      %213 = vmatprep.subr.mxu0 0.0
      %214 = vmatpush1.msra.mxu0 %v186
      %215 = vmatprep.subr.mxu0 0.0
      %216 = vmatpush1.msra.mxu0 %v187
      %217 = vmatprep.subr.mxu0 0.0
      %218 = vmatpush1.msra.mxu0 %v188
      %219 = vmatprep.subr.mxu0 0.0
      %220 = vmatpush1.msra.mxu0 %v189
      %221 = vmatprep.subr.mxu0 0.0
      %222 = vmatpush1.msra.mxu0 %v190
      %223 = vmatprep.subr.mxu0 0.0
      %224 = vmatpush1.msra.mxu0 %v191
      %225 = vmatprep.subr.mxu0 0.0
      %226 = vmatpush1.msra.mxu0 %v192
      %227 = vmatprep.subr.mxu0 0.0
      %228 = vmatpush1.msra.mxu0 %v193
      %229 = vmatprep.subr.mxu0 0.0
      %230 = vmatpush1.msra.mxu0 %v194
      %231 = vmatprep.subr.mxu0 0.0
      %232 = vmatpush1.msra.mxu0 %v195
      %233 = vmatprep.subr.mxu0 0.0
      %234 = vmatpush1.msra.mxu0 %v196
      %235 = vmatprep.subr.mxu0 0.0
      %236 = vmatpush1.msra.mxu0 %v197
      %237 = vmatprep.subr.mxu0 0.0
      %238 = vmatpush1.msra.mxu0 0.0
      %239 = vmatprep.subr.mxu0 0.0
      %240 = vmatpush1.msra.mxu0 0.0
      %241 = vmatprep.subr.mxu0 0.0
      %242 = vmatpush1.msra.mxu0 0.0
      %243 = vmatprep.subr.mxu0 0.0
      %244 = vmatpush1.msra.mxu0 0.0
      %245 = vmatprep.subr.mxu0 0.0
      %246 = vmatpush1.msra.mxu0 0.0
      %247 = vmatprep.subr.mxu0 0.0
      %248 = vmatpush1.msra.mxu0 0.0
      %249 = vmatprep.subr.mxu0 0.0
      %250 = vmatpush1.msra.mxu0 0.0
      %251 = vmatprep.subr.mxu0 0.0
      %252 = vmatpush1.msra.mxu0 0.0
      %253 = vmatprep.subr.mxu0 0.0
      %254 = vmatpush1.msra.mxu0 0.0
      %255 = vmatprep.subr.mxu0 0.0
      %256 = vmatpush1.msra.mxu0 0.0
      %257 = vmatprep.subr.mxu0 0.0
      %258 = vmatpush1.msra.mxu0 0.0
      %259 = vmatprep.subr.mxu0 0.0
      %260 = vmatpush1.msra.mxu0 0.0
      %261 = vmatprep.subr.mxu0 0.0
      %262 = vmatpush1.msra.mxu0 0.0
      %263 = vmatprep.subr.mxu0 0.0
      %264 = vmatpush1.msra.mxu0 0.0
      %265 = vmatprep.subr.mxu0 0.0
      %266 = vmatpush1.msra.mxu0 0.0
      %267 = vmatprep.subr.mxu0 0.0
      %268 = vmatpush1.msra.mxu0 0.0
      %269 = vmatprep.mubr.f32.mxu0 0.0
      %270 = vmatmul.mubr.f32.gmra.mrb[0].mxu0 %v178
      %v271 = vpop.f32.mrb[0].mxu0
      %v272 = vadd.f32 %v203, %v271
      %v273 = vpop.f32.mrb[0].mxu0
      %274 = vmatprep.mubr.f32.mxu0 0.0
      %275 = vmatmul.mubr.f32.gmra.mrb[0].mxu0 %v179
      %v276 = vpop.f32.mrb[0].mxu0
      %v277 = vadd.f32 %v203, %v276
      %v278 = vpop.f32.mrb[0].mxu0
      %279 = vmatprep.mubr.f32.mxu0 0.0
      %280 = vmatmul.mubr.f32.gmra.mrb[0].mxu0 %v180
      %v281 = vpop.f32.mrb[0].mxu0
      %v282 = vadd.f32 %v203, %v281
      %v283 = vpop.f32.mrb[0].mxu0
      %284 = vmatprep.mubr.f32.mxu0 0.0
      %285 = vmatmul.mubr.f32.gmra.mrb[0].mxu0 %v181
      %v286 = vpop.f32.mrb[0].mxu0
      %v287 = vadd.f32 %v203, %v286
      %v288 = vpop.f32.mrb[0].mxu0
      %289 = vdwg.mxu0
      %v290 = vpack.c.bf16 %v277, %v272
      %v291 = vpack.c.bf16 %v287, %v282
      %v294 = vunpack.c.l.b16 %v290
      %v295 = vunpack.c.h.b16 %v290
      %v296 = vunpack.c.l.b16 %v291
      %v297 = vunpack.c.h.b16 %v291
      %v298 = vpack.c.b16 %v294, %v294
      %v299 = vpack.c.b16 %v295, %v295
      %v300 = vpack.c.b16 %v296, %v296
      %v301 = vpack.c.b16 %v297, %v297
      %306 = vst [vmem:[%s172] sm:$0xf] %v298
      %307 = vst [vmem:[%s172 + $0x4] sm:$0xf] %v299
      %308 = vst [vmem:[%s172 + $0x8] sm:$0xf] %v300
      %309 = vst [vmem:[%s172 + $0xc] sm:$0xf] %v301
      %s310 = smul.u32 4, %s14
      %p311 = scmp.lt.s32.totalorder %s310, 15
      %s312 = scalar_select %p311, %s310, 15
      %s313 = smul.addr %s312, 4
      %s314 = scalar_lea.vmem %s3, %s313
      // Predicated region
      $region33: #{_forward.9} parent=31 // pred_check
        %p315 = pneg %p100
      $region34: #{_forward.9} parent=31 // pred_check_branch
        %317 = sbr.rel (%p315) target = $region36
      $region35: #{_forward.9} parent=31 // pred_region
        %s318 = smul.u32 4, %s14
      $region36: #{_forward.9} parent=31 // pred_fallthru
        _
    $region32: #{_forward.9} parent=5 // pred_fallthru
      _
    %p319 = scmp.le.s32.totalorder 2, %s9
    // Predicated region
    $region37: #{_forward.9} parent=5 // pred_check
      %p320 = pneg %p319
    $region38: #{_forward.9} parent=5 // pred_check_branch
      %322 = sbr.rel (%p320) target = $region40
    $region39: #{_forward.9} parent=5 // pred_region
      %s323 = ssub.s32 %s9, 2
      // Predicated region
      $region41: #{_forward.9} parent=39 // pred_check
        %p324 = pneg %p106
      $region42: #{_forward.9} parent=39 // pred_check_branch
        %326 = sbr.rel (%p324) target = $region44
      $region43: #{_forward.9} parent=39 // pred_region
        %s327 = smul.u32 4, %s15
        %p328 = scmp.lt.s32.totalorder %s327, 15
        %s329 = scalar_select %p328, %s327, 15
        %s330 = smul.addr %s329, 4
        %s331 = scalar_lea.vmem %s3, %s330
      $region44: #{_forward.9} parent=39 // pred_fallthru
        _
    $region40: #{_forward.9} parent=5 // pred_fallthru
      _
  $region6: #{_forward.9} parent=0 // loop_footer
    %s13 = sadd.s32 1, %s9
  $region7: #{_forward.9} parent=0 // loop_footer_branch
    %8 = sbr.rel target = $region3
  $region8: #{_forward.9} parent=0 // loop_exit
    _

// kernel: _forward.11
$region0: #{_forward.11}
  #allocation0 [shape = 'u32[]', space=smem, size = 0x4, offset = 0x4, fixed_abs, tag = 'smem constant byte address 0x4 - core index']
  #allocation1 [shape = 'u32[144,128]{1,0:T(1,128)}', space=vmem, size = 0x12000, scoped, tag = 'internal scratch']
  %s0 = inlined_call_operand.vmem [shape: s8[128,128], index: 0, kind: input, shape index: {}]
  %s1 = inlined_call_operand.vmem [shape: s8[128,128], index: 1, kind: input, shape index: {}]
  %s2 = inlined_call_operand.vmem [shape: bf16[128,128], index: 2, kind: input, shape index: {}]
  %s3 = inlined_call_operand.vmem [shape: bf16[128,128], index: 3, kind: input, shape index: {}]
  %s4 = inlined_call_operand.vmem [shape: f32[128,128], index: 4, kind: output, shape index: {}]
  %s5 = sld [smem:[#allocation0]]
  $region49: #{_forward.11} parent=0
    _
  %s7 = ssub.s32 1, %s5
  %s8 = scalar_select 0, %s7, %s5
  loop: start=0, step=1, limit=6
  $region2: #{_forward.11} parent=0 // loop_pre_header
    _
  $region3: #{_forward.11} parent=0 // loop_header
    %s10 = sphi 0, %s14
    %p11 = scmp.ge.s32.totalorder %s10, 6
    %s20 = sphi 0, %s22
    %s23 = sphi 0, %s20
    %s24 = sphi 0, %s23
    %s40 = sphi 0, %s24
    %s46 = sphi 0, %s48
    %s49 = sphi 0, %s46
    %s50 = sphi 0, %s49
    %s66 = sphi 0, %s50
    %s70 = sphi 0, %s70
    %s72 = sphi 0, %s70
    %s73 = sphi 0, %s72
    %s87 = sphi 0, %s73
    %s91 = sphi 0, %s91
    %s93 = sphi 0, %s91
    %s94 = sphi 0, %s93
    %s108 = sphi 0, %s94
    %s114 = sphi 0, %s116
    %s117 = sphi 0, %s114
    %s118 = sphi 0, %s117
    %s134 = sphi 0, %s118
  $region4: #{_forward.11} parent=0 // loop_header_branch
    %13 = sbr.rel (%p11) target = $region8
  $region5: #{_forward.11} parent=0 // loop_body
    %s15 = ssub.s32 %s10, 1
    %s16 = ssub.s32 %s10, 2
    %s17 = sadd.s32 %s10, 1
    %s18 = ssub.s32 %s10, %s17
    %p19 = scmp.eq.s32.totalorder %s18, 0
    %s21 = sadd.s32 %s20, 1
    %s22 = scalar_select %p19, %s20, %s21
    %p25 = pneg %p19
    %p26 = scmp.eq.s32.totalorder %s10, 3
    %p27 = por %p25, %p26
    %p28 = scmp.ne.s32.totalorder %s20, %s23
    %p29 = scmp.eq.s32.totalorder %s10, 0
    %p30 = por %p28, %p29
    %p31 = scmp.ne.s32.totalorder %s20, %s23
    %p32 = scmp.eq.s32.totalorder %s15, 3
    %p33 = por %p31, %p32
    %p34 = scmp.ne.s32.totalorder %s23, %s24
    %p35 = scmp.eq.s32.totalorder %s15, 0
    %p36 = por %p34, %p35
    %p37 = scmp.ne.s32.totalorder %s23, %s24
    %p38 = scmp.eq.s32.totalorder %s16, 3
    %p39 = por %p37, %p38
    %p41 = scmp.ne.s32.totalorder %s24, %s40
    %p42 = scmp.eq.s32.totalorder %s16, 0
    %p43 = por %p41, %p42
    %s44 = ssub.s32 %s10, %s17
    %p45 = scmp.eq.s32.totalorder %s44, 0
    %s47 = sadd.s32 %s46, 1
    %s48 = scalar_select %p45, %s46, %s47
    %p51 = pneg %p45
    %p52 = scmp.eq.s32.totalorder %s10, 3
    %p53 = por %p51, %p52
    %p54 = scmp.ne.s32.totalorder %s46, %s49
    %p55 = scmp.eq.s32.totalorder %s10, 0
    %p56 = por %p54, %p55
    %p57 = scmp.ne.s32.totalorder %s46, %s49
    %p58 = scmp.eq.s32.totalorder %s15, 3
    %p59 = por %p57, %p58
    %p60 = scmp.ne.s32.totalorder %s49, %s50
    %p61 = scmp.eq.s32.totalorder %s15, 0
    %p62 = por %p60, %p61
    %p63 = scmp.ne.s32.totalorder %s49, %s50
    %p64 = scmp.eq.s32.totalorder %s16, 3
    %p65 = por %p63, %p64
    %p67 = scmp.ne.s32.totalorder %s50, %s66
    %p68 = scmp.eq.s32.totalorder %s16, 0
    %p69 = por %p67, %p68
    %s71 = sadd.s32 %s70, 1
    %p74 = scmp.eq.s32.totalorder %s10, 3
    %p75 = scmp.ne.s32.totalorder %s70, %s72
    %p76 = scmp.eq.s32.totalorder %s10, 0
    %p77 = por %p75, %p76
    %p78 = scmp.ne.s32.totalorder %s70, %s72
    %p79 = scmp.eq.s32.totalorder %s15, 3
    %p80 = por %p78, %p79
    %p81 = scmp.ne.s32.totalorder %s72, %s73
    %p82 = scmp.eq.s32.totalorder %s15, 0
    %p83 = por %p81, %p82
    %p84 = scmp.ne.s32.totalorder %s72, %s73
    %p85 = scmp.eq.s32.totalorder %s16, 3
    %p86 = por %p84, %p85
    %p88 = scmp.ne.s32.totalorder %s73, %s87
    %p89 = scmp.eq.s32.totalorder %s16, 0
    %p90 = por %p88, %p89
    %s92 = sadd.s32 %s91, 1
    %p95 = scmp.eq.s32.totalorder %s10, 3
    %p96 = scmp.ne.s32.totalorder %s91, %s93
    %p97 = scmp.eq.s32.totalorder %s10, 0
    %p98 = por %p96, %p97
    %p99 = scmp.ne.s32.totalorder %s91, %s93
    %p100 = scmp.eq.s32.totalorder %s15, 3
    %p101 = por %p99, %p100
    %p102 = scmp.ne.s32.totalorder %s93, %s94
    %p103 = scmp.eq.s32.totalorder %s15, 0
    %p104 = por %p102, %p103
    %p105 = scmp.ne.s32.totalorder %s93, %s94
    %p106 = scmp.eq.s32.totalorder %s16, 3
    %p107 = por %p105, %p106
    %p109 = scmp.ne.s32.totalorder %s94, %s108
    %p110 = scmp.eq.s32.totalorder %s16, 0
    %p111 = por %p109, %p110
    %s112 = ssub.s32 %s10, %s17
    %p113 = scmp.eq.s32.totalorder %s112, 0
    %s115 = sadd.s32 %s114, 1
    %s116 = scalar_select %p113, %s114, %s115
    %p119 = pneg %p113
    %p120 = scmp.eq.s32.totalorder %s10, 3
    %p121 = por %p119, %p120
    %p122 = scmp.ne.s32.totalorder %s114, %s117
    %p123 = scmp.eq.s32.totalorder %s10, 0
    %p124 = por %p122, %p123
    %p125 = scmp.ne.s32.totalorder %s114, %s117
    %p126 = scmp.eq.s32.totalorder %s15, 3
    %p127 = por %p125, %p126
    %p128 = scmp.ne.s32.totalorder %s117, %s118
    %p129 = scmp.eq.s32.totalorder %s15, 0
    %p130 = por %p128, %p129
    %p131 = scmp.ne.s32.totalorder %s117, %s118
    %p132 = scmp.eq.s32.totalorder %s16, 3
    %p133 = por %p131, %p132
    %p135 = scmp.ne.s32.totalorder %s118, %s134
    %p136 = scmp.eq.s32.totalorder %s16, 0
    %p137 = por %p135, %p136
    %p138 = scmp.le.s32.totalorder 1, %s10
    %p139 = scmp.lt.s32.totalorder %s10, 5
    %p140 = pnand %p138, %p139
    %p141 = pneg %p140
    // Predicated region
    $region9: #{_forward.11} parent=5 // pred_check
      _
    $region10: #{_forward.11} parent=5 // pred_check_branch
      %143 = sbr.rel (%p140) target = $region12
    $region11: #{_forward.11} parent=5 // pred_region
      %s144 = ssub.s32 %s10, 1
      // Predicated region
      $region13: #{_forward.11} parent=11 // pred_check
        %p145 = pneg %p83
      $region14: #{_forward.11} parent=11 // pred_check_branch
        %147 = sbr.rel (%p145) target = $region16
      $region15: #{_forward.11} parent=11 // pred_region
        _
      $region16: #{_forward.11} parent=11 // pred_fallthru
        _
      // Predicated region
      $region17: #{_forward.11} parent=11 // pred_check
        %p148 = pneg %p104
      $region18: #{_forward.11} parent=11 // pred_check_branch
        %150 = sbr.rel (%p148) target = $region20
      $region19: #{_forward.11} parent=11 // pred_region
        _
      $region20: #{_forward.11} parent=11 // pred_fallthru
        _
    $region12: #{_forward.11} parent=5 // pred_fallthru
      _
    %p151 = scmp.lt.s32.totalorder %s10, 4
    // Predicated region
    $region21: #{_forward.11} parent=5 // pred_check
      %p152 = pneg %p151
    $region22: #{_forward.11} parent=5 // pred_check_branch
      %154 = sbr.rel (%p152) target = $region24
    $region23: #{_forward.11} parent=5 // pred_region
      // Predicated region
      $region25: #{_forward.11} parent=23 // pred_check
        %p155 = pneg %p30
      $region26: #{_forward.11} parent=23 // pred_check_branch
        %157 = sbr.rel (%p155) target = $region28
      $region27: #{_forward.11} parent=23 // pred_region
        %p158 = scmp.lt.s32.totalorder %s10, 3
        %s159 = scalar_select %p158, %s10, 3
        %s160 = smul.addr %s159, 8
        %s161 = scalar_lea.vmem %s0, %s160
      $region28: #{_forward.11} parent=23 // pred_fallthru
        _
      // Predicated region
      $region29: #{_forward.11} parent=23 // pred_check
        %p162 = pneg %p56
      $region30: #{_forward.11} parent=23 // pred_check_branch
        %164 = sbr.rel (%p162) target = $region32
      $region31: #{_forward.11} parent=23 // pred_region
        %p165 = scmp.lt.s32.totalorder %s10, 3
        %s166 = scalar_select %p165, %s10, 3
        %s167 = smul.addr %s166, 8
        %s168 = scalar_lea.vmem %s1, %s167
      $region32: #{_forward.11} parent=23 // pred_fallthru
        _
    $region24: #{_forward.11} parent=5 // pred_fallthru
      _
    %p169 = scmp.le.s32.totalorder 1, %s10
    %p170 = scmp.lt.s32.totalorder %s10, 5
    %p171 = pnand %p169, %p170
    %p172 = pneg %p171
    // Predicated region
    $region33: #{_forward.11} parent=5 // pred_check
      _
    $region34: #{_forward.11} parent=5 // pred_check_branch
      %174 = sbr.rel (%p171) target = $region36
    $region35: #{_forward.11} parent=5 // pred_region
      %s175 = ssub.s32 %s10, 1
      %p176 = scmp.lt.s32.totalorder %s15, 3
      %s177 = scalar_select %p176, %s15, 3
      %s178 = smul.addr %s177, 8
      %s179 = scalar_lea.vmem %s0, %s178
      %p180 = pneg %p36
      %p181 = pneg %p33
      %p182 = scmp.lt.s32.totalorder %s15, 3
      %s183 = scalar_select %p182, %s15, 3
      %s184 = smul.addr %s183, 8
      %s185 = scalar_lea.vmem %s1, %s184
      %p186 = pneg %p62
      %p187 = pneg %p59
      %p188 = pneg %p83
      %p189 = pneg %p80
      %p190 = pneg %p104
      %p191 = pneg %p101
      %p192 = pneg %p130
      %p193 = pneg %p127
      %s194 = smul.u32 4, %s15
      %p195 = scmp.lt.s32.totalorder %s194, 15
      %s196 = scalar_select %p195, %s194, 15
      %s197 = smul.addr %s196, 8
      %s198 = scalar_lea.vmem %s4, %s197
      %p199 = scmp.lt.s32.totalorder %s15, 3
      %s200 = scalar_select %p199, %s15, 3
      %s201 = smul.addr %s200, 8
      %s202 = scalar_lea.vmem %s0, %s201
      %p203 = scmp.lt.s32.totalorder %s15, 3
      %s204 = scalar_select %p203, %s15, 3
      %s205 = smul.addr %s204, 8
      %s206 = scalar_lea.vmem %s1, %s205
      %s207 = smul.u32 4, %s15
      %p208 = scmp.lt.s32.totalorder %s207, 15
      %s209 = scalar_select %p208, %s207, 15
      %s210 = smul.addr %s209, 8
      %s211 = scalar_lea.vmem %s4, %s210
      %s212 = smul.u32 4, %s15
      %v214 = vld [vmem:[%s202] sm:$0xff]
      %v215 = vunpack.c.l.s8.bf16 %v214
      %v216 = vunpack.c.h.s8.bf16 %v214
      %v217 = vld [vmem:[%s206] sm:$0xff]
      %v218 = vunpack.c.l.s8.bf16 %v217
      %v219 = vunpack.c.h.s8.bf16 %v217
      %v220 = vld [vmem:[%s2] sm:$0xf]
      %v221 = vld [vmem:[%s2 + $0x4] sm:$0xf]
      %v222 = vld [vmem:[%s2 + $0x8] sm:$0xf]
      %v223 = vld [vmem:[%s2 + $0xc] sm:$0xf]
      %v224 = vld [vmem:[%s2 + $0x10] sm:$0xf]
      %v225 = vld [vmem:[%s2 + $0x14] sm:$0xf]
      %v226 = vld [vmem:[%s2 + $0x18] sm:$0xf]
      %v227 = vld [vmem:[%s2 + $0x1c] sm:$0xf]
      %v228 = vld [vmem:[%s2 + $0x20] sm:$0xf]
      %v229 = vld [vmem:[%s2 + $0x24] sm:$0xf]
      %v230 = vld [vmem:[%s2 + $0x28] sm:$0xf]
      %v231 = vld [vmem:[%s2 + $0x2c] sm:$0xf]
      %v232 = vld [vmem:[%s2 + $0x30] sm:$0xf]
      %v233 = vld [vmem:[%s2 + $0x34] sm:$0xf]
      %v234 = vld [vmem:[%s2 + $0x38] sm:$0xf]
      %v235 = vld [vmem:[%s2 + $0x3c] sm:$0xf]
      %v236 = vld [vmem:[%s3] sm:$0xf]
      %v237 = vld [vmem:[%s3 + $0x4] sm:$0xf]
      %v238 = vld [vmem:[%s3 + $0x8] sm:$0xf]
      %v239 = vld [vmem:[%s3 + $0xc] sm:$0xf]
      %v240 = vld [vmem:[%s3 + $0x10] sm:$0xf]
      %v241 = vld [vmem:[%s3 + $0x14] sm:$0xf]
      %v242 = vld [vmem:[%s3 + $0x18] sm:$0xf]
      %v243 = vld [vmem:[%s3 + $0x1c] sm:$0xf]
      %v244 = vld [vmem:[%s3 + $0x20] sm:$0xf]
      %v245 = vld [vmem:[%s3 + $0x24] sm:$0xf]
      %v246 = vld [vmem:[%s3 + $0x28] sm:$0xf]
      %v247 = vld [vmem:[%s3 + $0x2c] sm:$0xf]
      %v248 = vld [vmem:[%s3 + $0x30] sm:$0xf]
      %v249 = vld [vmem:[%s3 + $0x34] sm:$0xf]
      %v250 = vld [vmem:[%s3 + $0x38] sm:$0xf]
      %v251 = vld [vmem:[%s3 + $0x3c] sm:$0xf]
      %v268 = vunpack.c.l.b16 %v236
      %v269 = vunpack.c.l.b16 %v237
      %v270 = vunpack.c.l.b16 %v238
      %v271 = vunpack.c.l.b16 %v239
      %v272 = vunpack.c.l.b16 %v240
      %v273 = vunpack.c.l.b16 %v241
      %v274 = vunpack.c.l.b16 %v242
      %v275 = vunpack.c.l.b16 %v243
      %v276 = vunpack.c.l.b16 %v244
      %v277 = vunpack.c.l.b16 %v245
      %v278 = vunpack.c.l.b16 %v246
      %v279 = vunpack.c.l.b16 %v247
      %v280 = vunpack.c.l.b16 %v248
      %v281 = vunpack.c.l.b16 %v249
      %v282 = vunpack.c.l.b16 %v250
      %v283 = vunpack.c.l.b16 %v251
      %v284 = vpack.c.b16 %v269, %v268
      %v285 = vpack.c.b16 %v271, %v270
      %v286 = vpack.c.b16 %v273, %v272
      %v287 = vpack.c.b16 %v275, %v274
      %v288 = vpack.c.b16 %v277, %v276
      %v289 = vpack.c.b16 %v279, %v278
      %v290 = vpack.c.b16 %v281, %v280
      %v291 = vpack.c.b16 %v283, %v282
      %300 = vmatprep.subr.bf16.mxu0 0
      %301 = vmatpush1.bf16.msra.mxu0 %v284
      %302 = vmatprep.subr.bf16.mxu0 0
      %303 = vmatpush1.bf16.msra.mxu0 %v285
      %304 = vmatprep.subr.bf16.mxu0 0
      %305 = vmatpush1.bf16.msra.mxu0 %v286
      %306 = vmatprep.subr.bf16.mxu0 0
      %307 = vmatpush1.bf16.msra.mxu0 %v287
      %308 = vmatprep.subr.bf16.mxu0 0
      %309 = vmatpush1.bf16.msra.mxu0 %v288
      %310 = vmatprep.subr.bf16.mxu0 0
      %311 = vmatpush1.bf16.msra.mxu0 %v289
      %312 = vmatprep.subr.bf16.mxu0 0
      %313 = vmatpush1.bf16.msra.mxu0 %v290
      %314 = vmatprep.subr.bf16.mxu0 0
      %315 = vmatpush1.bf16.msra.mxu0 %v291
      %316 = vmatprep.subr.bf16.mxu0 0
      %317 = vmatpush1.bf16.msra.mxu0 0
      %318 = vmatprep.subr.bf16.mxu0 0
      %319 = vmatpush1.bf16.msra.mxu0 0
      %320 = vmatprep.subr.bf16.mxu0 0
      %321 = vmatpush1.bf16.msra.mxu0 0
      %322 = vmatprep.subr.bf16.mxu0 0
      %323 = vmatpush1.bf16.msra.mxu0 0
      %324 = vmatprep.subr.bf16.mxu0 0
      %325 = vmatpush1.bf16.msra.mxu0 0
      %326 = vmatprep.subr.bf16.mxu0 0
      %327 = vmatpush1.bf16.msra.mxu0 0
      %328 = vmatprep.subr.bf16.mxu0 0
      %329 = vmatpush1.bf16.msra.mxu0 0
      %330 = vmatprep.subr.bf16.mxu0 0
      %331 = vmatpush1.bf16.msra.mxu0 0
      %332 = vmatprep.mubr.bf16.mxu0 0
      %333 = vmatmul.mubr.bf16.gmra.mrb[0].mxu0 %v218
      %v334 = vpop.f32.mrb[0].mxu0
      %v335 = vadd.f32 0.0, %v334
      %v336 = vpop.f32.mrb[0].mxu0
      %v337 = vpop.f32.mrb[0].mxu0
      %v338 = vadd.f32 0.0, %v337
      %v339 = vpop.f32.mrb[0].mxu0
      %340 = vmatprep.mubr.bf16.mxu0 0
      %341 = vmatmul.mubr.bf16.gmra.mrb[0].mxu0 %v219
      %v342 = vpop.f32.mrb[0].mxu0
      %v343 = vadd.f32 0.0, %v342
      %v344 = vpop.f32.mrb[0].mxu0
      %v345 = vpop.f32.mrb[0].mxu0
      %v346 = vadd.f32 0.0, %v345
      %v347 = vpop.f32.mrb[0].mxu0
      %348 = vdwg.mxu0
      %v365 = vunpack.c.l.b16 %v220
      %v366 = vunpack.c.l.b16 %v221
      %v367 = vunpack.c.l.b16 %v222
      %v368 = vunpack.c.l.b16 %v223
      %v369 = vunpack.c.l.b16 %v224
      %v370 = vunpack.c.l.b16 %v225
      %v371 = vunpack.c.l.b16 %v226
      %v372 = vunpack.c.l.b16 %v227
      %v373 = vunpack.c.l.b16 %v228
      %v374 = vunpack.c.l.b16 %v229
      %v375 = vunpack.c.l.b16 %v230
      %v376 = vunpack.c.l.b16 %v231
      %v377 = vunpack.c.l.b16 %v232
      %v378 = vunpack.c.l.b16 %v233
      %v379 = vunpack.c.l.b16 %v234
      %v380 = vunpack.c.l.b16 %v235
      %v381 = vpack.c.b16 %v366, %v365
      %v382 = vpack.c.b16 %v368, %v367
      %v383 = vpack.c.b16 %v370, %v369
      %v384 = vpack.c.b16 %v372, %v371
      %v385 = vpack.c.b16 %v374, %v373
      %v386 = vpack.c.b16 %v376, %v375
      %v387 = vpack.c.b16 %v378, %v377
      %v388 = vpack.c.b16 %v380, %v379
      %397 = vmatprep.subr.bf16.mxu0 0
      %398 = vmatpush1.bf16.msra.mxu0 %v381
      %399 = vmatprep.subr.bf16.mxu0 0
      %400 = vmatpush1.bf16.msra.mxu0 %v382
      %401 = vmatprep.subr.bf16.mxu0 0
      %402 = vmatpush1.bf16.msra.mxu0 %v383
      %403 = vmatprep.subr.bf16.mxu0 0
      %404 = vmatpush1.bf16.msra.mxu0 %v384
      %405 = vmatprep.subr.bf16.mxu0 0
      %406 = vmatpush1.bf16.msra.mxu0 %v385
      %407 = vmatprep.subr.bf16.mxu0 0
      %408 = vmatpush1.bf16.msra.mxu0 %v386
      %409 = vmatprep.subr.bf16.mxu0 0
      %410 = vmatpush1.bf16.msra.mxu0 %v387
      %411 = vmatprep.subr.bf16.mxu0 0
      %412 = vmatpush1.bf16.msra.mxu0 %v388
      %413 = vmatprep.subr.bf16.mxu0 0
      %414 = vmatpush1.bf16.msra.mxu0 0
      %415 = vmatprep.subr.bf16.mxu0 0
      %416 = vmatpush1.bf16.msra.mxu0 0
      %417 = vmatprep.subr.bf16.mxu0 0
      %418 = vmatpush1.bf16.msra.mxu0 0
      %419 = vmatprep.subr.bf16.mxu0 0
      %420 = vmatpush1.bf16.msra.mxu0 0
      %421 = vmatprep.subr.bf16.mxu0 0
      %422 = vmatpush1.bf16.msra.mxu0 0
      %423 = vmatprep.subr.bf16.mxu0 0
      %424 = vmatpush1.bf16.msra.mxu0 0
      %425 = vmatprep.subr.bf16.mxu0 0
      %426 = vmatpush1.bf16.msra.mxu0 0
      %427 = vmatprep.subr.bf16.mxu0 0
      %428 = vmatpush1.bf16.msra.mxu0 0
      %429 = vmatprep.mubr.bf16.mxu0 0
      %430 = vmatmul.mubr.bf16.gmra.mrb[0].mxu0 %v215
      %v431 = vpop.f32.mrb[0].mxu0
      %v432 = vadd.f32 %v335, %v431
      %v433 = vpop.f32.mrb[0].mxu0
      %v434 = vpop.f32.mrb[0].mxu0
      %v435 = vadd.f32 %v338, %v434
      %v436 = vpop.f32.mrb[0].mxu0
      %437 = vmatprep.mubr.bf16.mxu0 0
      %438 = vmatmul.mubr.bf16.gmra.mrb[0].mxu0 %v216
      %v439 = vpop.f32.mrb[0].mxu0
      %v440 = vadd.f32 %v343, %v439
      %v441 = vpop.f32.mrb[0].mxu0
      %v442 = vpop.f32.mrb[0].mxu0
      %v443 = vadd.f32 %v346, %v442
      %v444 = vpop.f32.mrb[0].mxu0
      %445 = vdwg.mxu0
      %v446 = vlaneseq
      %v447 = vand.u32 %v446, 127
      %vm448 = vcmp.lt.s32.totalorder %v447, 8
      %v449 = vsel %vm448, %v432, -inf
      %v450 = vsel %vm448, %v435, -inf
      %v451 = vsel %vm448, %v440, -inf
      %v452 = vsel %vm448, %v443, -inf
      %453 = vmax.xlane.f32.xlu0 %v449
      %v454 = vpop.xlane.xlu0 %453
      %455 = vmax.xlane.f32.xlu0 %v450
      %v456 = vpop.xlane.xlu0 %455
      %457 = vmax.xlane.f32.xlu0 %v451
      %v458 = vpop.xlane.xlu0 %457
      %459 = vmax.xlane.f32.xlu0 %v452
      %v460 = vpop.xlane.xlu0 %459
      %v461 = vsub.f32 %v449, %v454
      %v462 = vsub.f32 %v450, %v456
      %v463 = vsub.f32 %v451, %v458
      %v464 = vsub.f32 %v452, %v460
      %v465 = vmul.f32 %v461, 1.442695
      %v466 = vpow.pop %v465
      %v467 = vmul.f32 %v462, 1.442695
      %v468 = vpow.pop %v467
      %v469 = vmul.f32 %v463, 1.442695
      %v470 = vpow.pop %v469
      %v471 = vmul.f32 %v464, 1.442695
      %v472 = vpow.pop %v471
      %473 = vadd.xlane.f32.xlu0 %v466
      %v474 = vpop.xlane.xlu0 %473
      %475 = vadd.xlane.f32.xlu0 %v468
      %v476 = vpop.xlane.xlu0 %475
      %477 = vadd.xlane.f32.xlu0 %v470
      %v478 = vpop.xlane.xlu0 %477
      %479 = vadd.xlane.f32.xlu0 %v472
      %v480 = vpop.xlane.xlu0 %479
      %v481 = vlog2.pop %v474
      %v482 = vmul.f32 %v481, 0.6931472
      %v483 = vlog2.pop %v476
      %v484 = vmul.f32 %v483, 0.6931472
      %v485 = vlog2.pop %v478
      %v486 = vmul.f32 %v485, 0.6931472
      %v487 = vlog2.pop %v480
      %v488 = vmul.f32 %v487, 0.6931472
      %v489 = vsub.f32 %v461, %v482
      %v490 = vsub.f32 %v462, %v484
      %v491 = vsub.f32 %v463, %v486
      %v492 = vsub.f32 %v464, %v488
      %v493 = vsel %vm448, %v489, 0.0
      %v494 = vsel %vm448, %v490, 0.0
      %v495 = vsel %vm448, %v491, 0.0
      %v496 = vsel %vm448, %v492, 0.0
      %497 = vst [vmem:[%s211] sm:$0xff] %v493
      %498 = vst [vmem:[%s211 + $0x8] sm:$0xff] %v494
      %499 = vst [vmem:[%s211 + $0x10] sm:$0xff] %v495
      %500 = vst [vmem:[%s211 + $0x18] sm:$0xff] %v496
      %s501 = smul.u32 4, %s15
      %p502 = scmp.lt.s32.totalorder %s501, 15
      %s503 = scalar_select %p502, %s501, 15
      %s504 = smul.addr %s503, 8
      %s505 = scalar_lea.vmem %s4, %s504
      // Predicated region
      $region37: #{_forward.11} parent=35 // pred_check
        %p506 = pneg %p127
      $region38: #{_forward.11} parent=35 // pred_check_branch
        %508 = sbr.rel (%p506) target = $region40
      $region39: #{_forward.11} parent=35 // pred_region
        %s509 = smul.u32 4, %s15
      $region40: #{_forward.11} parent=35 // pred_fallthru
        _
    $region36: #{_forward.11} parent=5 // pred_fallthru
      _
    %p510 = scmp.le.s32.totalorder 2, %s10
    // Predicated region
    $region41: #{_forward.11} parent=5 // pred_check
      %p511 = pneg %p510
    $region42: #{_forward.11} parent=5 // pred_check_branch
      %513 = sbr.rel (%p511) target = $region44
    $region43: #{_forward.11} parent=5 // pred_region
      %s514 = ssub.s32 %s10, 2
      // Predicated region
      $region45: #{_forward.11} parent=43 // pred_check
        %p515 = pneg %p133
      $region46: #{_forward.11} parent=43 // pred_check_branch
        %517 = sbr.rel (%p515) target = $region48
      $region47: #{_forward.11} parent=43 // pred_region
        %s518 = smul.u32 4, %s16
        %p519 = scmp.lt.s32.totalorder %s518, 15
        %s520 = scalar_select %p519, %s518, 15
        %s521 = smul.addr %s520, 8
        %s522 = scalar_lea.vmem %s4, %s521
      $region48: #{_forward.11} parent=43 // pred_fallthru
        _
    $region44: #{_forward.11} parent=5 // pred_fallthru
      _
  $region6: #{_forward.11} parent=0 // loop_footer
    %s14 = sadd.s32 1, %s10
  $region7: #{_forward.11} parent=0 // loop_footer_branch
    %9 = sbr.rel target = $region3
  $region8: #{_forward.11} parent=0 // loop_exit
    _

</llo_original>
